<compile_context>
chip_gen: v7x
topology: tpu7x:2x2x1
jax: 0.10.0
libtpu: 0.0.40
codegen_flags: <defaults>
</compile_context>

<pallas_src>
import math

import jax
import jax.numpy as jnp
from jax import lax
from jax.experimental import pallas as pl
from jax.experimental.pallas import tpu as pltpu

# ---------------- config (small, consistent with the module) ----------------
B = 2        # batch
T = 8        # seq_len
D = 32       # d_model / embed_dim
H = 4        # encoder_attention_heads
HD = D // H  # head_dim
F = 64       # encoder_ffn_dim
W3 = 3 * D   # fused QKV output width
LN_EPS = 1e-5
assert W3 >= F, "bias slab width must be able to hold fc1 bias"


def _layer_norm(x, gamma, beta):
    mu = jnp.mean(x, axis=-1, keepdims=True)
    var = jnp.mean((x - mu) ** 2, axis=-1, keepdims=True)
    return (x - mu) * lax.rsqrt(var + LN_EPS) * gamma + beta


def _gelu_exact(x):
    # HF ACT2FN["gelu"] == exact erf-based GELU
    return 0.5 * x * (1.0 + lax.erf(x / math.sqrt(2.0)))


def _encoder_layer_kernel(h_ref, m_ref, wqkv_ref, woh_ref, w1_ref, w2_ref,
                          slab_ref, o_ref):
    layer = pl.program_id(0)

    # The activation is carried across the layer grid in the resident
    # (constant-index) output block: seed it from the input at layer 0.
    @pl.when(layer == 0)
    def _():
        o_ref[...] = h_ref[...]

    x = o_ref[...]                            # (B*T, D)
    mask = m_ref[...]                         # (B, T, T) additive mask

    # bias / LayerNorm vector slab for this layer: one DMA, static row slices.
    slab = slab_ref[0]                        # (8, 3D)
    bqkv = slab[0:1, :]                       # (1, 3D)  (q part pre-scaled)
    b1   = slab[1:2, :F]                      # (1, F)
    bo   = slab[2:3, :D]
    ln1g = slab[3:4, :D]
    ln1b = slab[4:5, :D]
    b2   = slab[5:6, :D]
    ln2g = slab[6:7, :D]
    ln2b = slab[7:8, :D]

    # --- fused Q/K/V projection (single MXU matmul, 96-wide output) ---
    qkv = jnp.dot(x, wqkv_ref[0], preferred_element_type=jnp.float32) + bqkv  # (B*T, 3D)

    # Head-major (H*B, T, HD) layout (batch index = h*B + b) via lane slices +
    # leading-dim reshapes; kept as the safest Mosaic lowering at these shapes.
    def heads(base):
        return jnp.concatenate(
            [qkv[:, base + h * HD: base + (h + 1) * HD].reshape(B, T, HD)
             for h in range(H)],
            axis=0)
    qh, kh, vh = heads(0), heads(D), heads(2 * D)

    # --- attention: one batched dot_general per stage over all B*H batches ---
    scores = jnp.einsum("bqd,bkd->bqk", qh, kh,
                        preferred_element_type=jnp.float32)   # (H*B, T, T)
    # broadcast the (B,T,T) mask over heads (no H-replicated mask copy)
    scores = (scores.reshape(H, B, T, T) + mask[None, :, :, :]).reshape(H * B, T, T)
    scores = scores - jnp.max(scores, axis=-1, keepdims=True)
    probs = jnp.exp(scores)
    probs = probs / jnp.sum(probs, axis=-1, keepdims=True)    # exact softmax
    ctx = jnp.einsum("bqk,bkd->bqd", probs, vh,
                     preferred_element_type=jnp.float32)      # (H*B, T, HD)

    # --- merge-heads + out_proj fused: attn = sum_h ctx_h @ Wo_h + bo ---
    ctx_h = ctx.reshape(H, B * T, HD)                         # leading-dim reshape
    attn = jnp.einsum("hrd,hde->hre", ctx_h, woh_ref[0],
                      preferred_element_type=jnp.float32)     # (H, B*T, D)
    attn = jnp.sum(attn, axis=0) + bo                         # (B*T, D)

    # residual + layernorm 1
    y = _layer_norm(x + attn, ln1g, ln1b)

    # --- feed forward ---
    ff = jnp.dot(y, w1_ref[0], preferred_element_type=jnp.float32) + b1
    ff = _gelu_exact(ff)
    ff = jnp.dot(ff, w2_ref[0], preferred_element_type=jnp.float32) + b2

    # residual + layernorm 2
    z = _layer_norm(y + ff, ln2g, ln2b)

    # TODO(synk): HF's inf/nan clamp only fires for fp16 overflow; it is dead
    # code for finite f32 inputs and is intentionally omitted here.
    o_ref[...] = z


def prepare_params(layer_params):
    """One-time packing of L layers: fold q-scaling, fuse QKV, head-major Wo,
    pack bias slab; everything stacked along a leading layer axis."""
    scaling = HD ** (-0.5)
    wqkv, woh, w1, w2, slabs = [], [], [], [], []
    for p in layer_params:
        wqkv.append(jnp.concatenate([p["wq"] * scaling, p["wk"], p["wv"]], axis=1))
        woh.append(p["wo"].reshape(H, HD, D))     # rows are head-major (h, hd)
        w1.append(p["w1"])
        w2.append(p["w2"])
        bqkv = jnp.concatenate([p["bq"] * scaling, p["bk"], p["bv"]], axis=1)
        s = jnp.zeros((8, W3), jnp.float32)
        s = s.at[0, :W3].set(bqkv[0])
        s = s.at[1, :F].set(p["b1"][0])
        s = s.at[2, :D].set(p["bo"][0])
        s = s.at[3, :D].set(p["ln1_g"][0])
        s = s.at[4, :D].set(p["ln1_b"][0])
        s = s.at[5, :D].set(p["b2"][0])
        s = s.at[6, :D].set(p["ln2_g"][0])
        s = s.at[7, :D].set(p["ln2_b"][0])
        slabs.append(s)
    return {"wqkv": jnp.stack(wqkv), "woh": jnp.stack(woh),
            "w1": jnp.stack(w1), "w2": jnp.stack(w2), "slab": jnp.stack(slabs)}


def bart_encoder_layers(hidden_states, attention_mask, prepared):
    """Apply L stacked BartEncoderLayers in one pallas_call (L=1 == the module).

    hidden_states: (B, T, D) f32; attention_mask: (B, 1, T, T) additive f32.
    """
    L = prepared["wqkv"].shape[0]
    x2 = hidden_states.reshape(B * T, D)      # free contiguous reshape
    mask = attention_mask.reshape(B, T, T)

    in_specs = [
        pl.BlockSpec((B * T, D), lambda l: (0, 0)),           # activation (resident)
        pl.BlockSpec((B, T, T), lambda l: (0, 0, 0)),         # mask (resident)
        pl.BlockSpec((1, D, W3), lambda l: (l, 0, 0)),        # Wqkv[l] (q pre-scaled)
        pl.BlockSpec((1, H, HD, D), lambda l: (l, 0, 0, 0)),  # Wo[l] head-major
        pl.BlockSpec((1, D, F), lambda l: (l, 0, 0)),         # W1[l]
        pl.BlockSpec((1, F, D), lambda l: (l, 0, 0)),         # W2[l]
        pl.BlockSpec((1, 8, W3), lambda l: (l, 0, 0)),        # bias/LN slab[l]
    ]

    # NOTE: layers are sequentially dependent -> "arbitrary".  Do NOT split the
    # 16 rows across v7x's two TensorCores at this size (guaranteed regression);
    # working set is ~40 KiB/layer, far under every generation's VMEM limit.
    out = pl.pallas_call(
        _encoder_layer_kernel,
        out_shape=jax.ShapeDtypeStruct((B * T, D), jnp.float32),
        grid_spec=pltpu.PrefetchScalarGridSpec(
            num_scalar_prefetch=0,
            grid=(L,),
            in_specs=in_specs,
            out_specs=pl.BlockSpec((B * T, D), lambda l: (0, 0)),
        ),
        compiler_params=pltpu.CompilerParams(
            dimension_semantics=("arbitrary",)),
    )(x2, mask, prepared["wqkv"], prepared["woh"], prepared["w1"],
      prepared["w2"], prepared["slab"])
    return out.reshape(B, T, D)               # free contiguous reshape


# ---------------- pure-JAX reference (for correctness check) ----------------
def reference_forward(x, attention_mask, p):
    mask = attention_mask.reshape(B, T, T)
    scaling = HD ** (-0.5)
    hp = lax.Precision.HIGHEST
    q = (jnp.dot(x, p["wq"], precision=hp) + p["bq"]) * scaling
    k = jnp.dot(x, p["wk"], precision=hp) + p["bk"]
    v = jnp.dot(x, p["wv"], precision=hp) + p["bv"]
    qh = q.reshape(B, T, H, HD).transpose(0, 2, 1, 3)
    kh = k.reshape(B, T, H, HD).transpose(0, 2, 1, 3)
    vh = v.reshape(B, T, H, HD).transpose(0, 2, 1, 3)
    scores = jnp.einsum("bhqd,bhkd->bhqk", qh, kh, precision=hp) + mask[:, None, :, :]
    probs = jax.nn.softmax(scores, axis=-1)
    attn = jnp.einsum("bhqk,bhkd->bhqd", probs, vh, precision=hp)
    attn = attn.transpose(0, 2, 1, 3).reshape(B, T, D)
    attn = jnp.dot(attn, p["wo"], precision=hp) + p["bo"]
    y = _layer_norm(x + attn, p["ln1_g"], p["ln1_b"])
    ff = _gelu_exact(jnp.dot(y, p["w1"], precision=hp) + p["b1"])
    ff = jnp.dot(ff, p["w2"], precision=hp) + p["b2"]
    return _layer_norm(y + ff, p["ln2_g"], p["ln2_b"])


def make_params(key):
    ks = jax.random.split(key, 12)
    s = 0.05
    return {
        # nn.Linear weights stored here already transposed to (in, out)
        "wq": jax.random.normal(ks[0], (D, D), jnp.float32) * s,
        "bq": jax.random.normal(ks[1], (1, D), jnp.float32) * s,
        "wk": jax.random.normal(ks[2], (D, D), jnp.float32) * s,
        "bk": jax.random.normal(ks[3], (1, D), jnp.float32) * s,
        "wv": jax.random.normal(ks[4], (D, D), jnp.float32) * s,
        "bv": jax.random.normal(ks[5], (1, D), jnp.float32) * s,
        "wo": jax.random.normal(ks[6], (D, D), jnp.float32) * s,
        "bo": jax.random.normal(ks[7], (1, D), jnp.float32) * s,
        "ln1_g": jnp.ones((1, D), jnp.float32),
        "ln1_b": jnp.zeros((1, D), jnp.float32),
        "w1": jax.random.normal(ks[8], (D, F), jnp.float32) * s,
        "b1": jax.random.normal(ks[9], (1, F), jnp.float32) * s,
        "w2": jax.random.normal(ks[10], (F, D), jnp.float32) * s,
        "b2": jax.random.normal(ks[11], (1, D), jnp.float32) * s,
        "ln2_g": jnp.ones((1, D), jnp.float32),
        "ln2_b": jnp.zeros((1, D), jnp.float32),
    }


if __name__ == "__main__":
    key = jax.random.PRNGKey(0)
    k_x, k_p = jax.random.split(key)
    x = jax.random.normal(k_x, (B, T, D), jnp.float32)

    # additive attention mask: (B, 1, T, T); mask out the last 2 src positions
    # of the second batch element with a large negative value.
    mask = jnp.zeros((B, 1, T, T), jnp.float32)
    mask = mask.at[1, :, :, -2:].set(-1e9)

    NUM_LAYERS = 4
    layer_keys = jax.random.split(k_p, NUM_LAYERS)
    layer_params = [make_params(k) for k in layer_keys]

    # 1) Exactly the module's semantics: a single BartEncoderLayer (L=1).
    prepared1 = prepare_params(layer_params[:1])
    out1 = jax.block_until_ready(bart_encoder_layers(x, mask, prepared1))
    ref1 = reference_forward(x, mask, layer_params[0])
    assert out1.shape == (B, T, D)
    err1 = jnp.max(jnp.abs(out1 - ref1))
    assert jnp.allclose(out1, ref1, atol=1e-3, rtol=1e-3), f"L=1 max abs diff = {err1}"

    # 2) Layer-stacked grid (the performance structure): L layers, one call,
    #    per-layer weight DMAs pipelined under the previous layer's compute.
    preparedL = prepare_params(layer_params)
    outL = jax.block_until_ready(bart_encoder_layers(x, mask, preparedL))
    refL = x
    for p in layer_params:
        refL = reference_forward(refL, mask, p)
    errL = jnp.max(jnp.abs(outL - refL))
    assert jnp.allclose(outL, refL, atol=1e-3, rtol=1e-3), \
        f"L={NUM_LAYERS} max abs diff = {errL}"

    print("KERNEL_OK")
</pallas_src>

<mosaic_0001>
module attributes {stable_mosaic.version = 11 : i64} {
  func.func @_encoder_layer_kernel(%arg0: i32, %arg1: memref<16x32xf32, #tpu.memory_space<vmem>>, %arg2: memref<2x8x8xf32, #tpu.memory_space<vmem>>, %arg3: memref<1x32x96xf32, #tpu.memory_space<vmem>>, %arg4: memref<1x4x8x32xf32, #tpu.memory_space<vmem>>, %arg5: memref<1x32x64xf32, #tpu.memory_space<vmem>>, %arg6: memref<1x64x32xf32, #tpu.memory_space<vmem>>, %arg7: memref<1x8x96xf32, #tpu.memory_space<vmem>>, %arg8: memref<16x32xf32, #tpu.memory_space<vmem>>) attributes {dimension_semantics = [#tpu.dimension_semantics<arbitrary>], iteration_bounds = array<i64: 1>, scalar_prefetch = 0 : i64, scratch_operands = 0 : i64, tpu.core_type = #tpu.core_type<tc>, window_params = [{pipeline_mode = #tpu.pipeline_mode<synchronous>, transform_indices = @transform_0, window_bounds = array<i64: 16, 32>}, {pipeline_mode = #tpu.pipeline_mode<synchronous>, transform_indices = @transform_1, window_bounds = array<i64: 2, 8, 8>}, {transform_indices = @transform_2, window_bounds = array<i64: 1, 32, 96>}, {transform_indices = @transform_3, window_bounds = array<i64: 1, 4, 8, 32>}, {transform_indices = @transform_4, window_bounds = array<i64: 1, 32, 64>}, {transform_indices = @transform_5, window_bounds = array<i64: 1, 64, 32>}, {transform_indices = @transform_6, window_bounds = array<i64: 1, 8, 96>}, {pipeline_mode = #tpu.pipeline_mode<synchronous>, transform_indices = @transform_7, window_bounds = array<i64: 16, 32>}]} {
    %c0_i32 = arith.constant 0 : i32
    %0 = arith.cmpi eq, %arg0, %c0_i32 : i32
    %1 = arith.extui %0 : i1 to i32
    %c0_i32_0 = arith.constant 0 : i32
    %2 = arith.cmpi ne, %1, %c0_i32_0 : i32
    scf.if %2 {
      %c0_44 = arith.constant 0 : index
      %c0_45 = arith.constant 0 : index
      %135 = vector.load %arg1[%c0_44, %c0_45] : memref<16x32xf32, #tpu.memory_space<vmem>>, vector<16x32xf32>
      %c0_46 = arith.constant 0 : index
      %c0_47 = arith.constant 0 : index
      %136 = vector.load %arg8[%c0_46, %c0_47] : memref<16x32xf32, #tpu.memory_space<vmem>>, vector<16x32xf32>
      tpu.vector_store %arg8[%c0_46, %c0_47], %135 {strides = array<i32>} : memref<16x32xf32, #tpu.memory_space<vmem>>, vector<16x32xf32>,
    } else {
    }
    %c0 = arith.constant 0 : index
    %c0_1 = arith.constant 0 : index
    %3 = vector.load %arg8[%c0, %c0_1] : memref<16x32xf32, #tpu.memory_space<vmem>>, vector<16x32xf32>
    %c0_2 = arith.constant 0 : index
    %c0_3 = arith.constant 0 : index
    %c0_4 = arith.constant 0 : index
    %4 = vector.load %arg2[%c0_2, %c0_3, %c0_4] : memref<2x8x8xf32, #tpu.memory_space<vmem>>, vector<2x8x8xf32>
    %c0_5 = arith.constant 0 : index
    %c0_6 = arith.constant 0 : index
    %c0_7 = arith.constant 0 : index
    %5 = vector.load %arg7[%c0_5, %c0_6, %c0_7] : memref<1x8x96xf32, #tpu.memory_space<vmem>>, vector<1x8x96xf32>
    %6 = vector.shape_cast %5 : vector<1x8x96xf32> to vector<8x96xf32>
    %7 = vector.extract_strided_slice %6 {offsets = [0, 0], sizes = [1, 96], strides = [1, 1]} : vector<8x96xf32> to vector<1x96xf32>
    %8 = vector.extract_strided_slice %6 {offsets = [1, 0], sizes = [1, 64], strides = [1, 1]} : vector<8x96xf32> to vector<1x64xf32>
    %9 = vector.extract_strided_slice %6 {offsets = [2, 0], sizes = [1, 32], strides = [1, 1]} : vector<8x96xf32> to vector<1x32xf32>
    %10 = vector.extract_strided_slice %6 {offsets = [3, 0], sizes = [1, 32], strides = [1, 1]} : vector<8x96xf32> to vector<1x32xf32>
    %11 = vector.extract_strided_slice %6 {offsets = [4, 0], sizes = [1, 32], strides = [1, 1]} : vector<8x96xf32> to vector<1x32xf32>
    %12 = vector.extract_strided_slice %6 {offsets = [5, 0], sizes = [1, 32], strides = [1, 1]} : vector<8x96xf32> to vector<1x32xf32>
    %13 = vector.extract_strided_slice %6 {offsets = [6, 0], sizes = [1, 32], strides = [1, 1]} : vector<8x96xf32> to vector<1x32xf32>
    %14 = vector.extract_strided_slice %6 {offsets = [7, 0], sizes = [1, 32], strides = [1, 1]} : vector<8x96xf32> to vector<1x32xf32>
    %c0_8 = arith.constant 0 : index
    %c0_9 = arith.constant 0 : index
    %c0_10 = arith.constant 0 : index
    %15 = vector.load %arg3[%c0_8, %c0_9, %c0_10] : memref<1x32x96xf32, #tpu.memory_space<vmem>>, vector<1x32x96xf32>
    %16 = vector.shape_cast %15 : vector<1x32x96xf32> to vector<32x96xf32>
    %cst = arith.constant dense<0.000000e+00> : vector<16x96xf32>
    %17 = tpu.matmul %3, %16, %cst {dimension_numbers = #tpu.dot_dimension_numbers<[1], [0], [0], [1], [0, 0, 1, 1], [], []>} : vector<16x32xf32>, vector<32x96xf32>, vector<16x96xf32> -> vector<16x96xf32>
    %18 = vector.broadcast %7 : vector<1x96xf32> to vector<16x96xf32>
    %19 = arith.addf %17, %18 : vector<16x96xf32>
    %20 = vector.extract_strided_slice %19 {offsets = [0, 0], sizes = [16, 8], strides = [1, 1]} : vector<16x96xf32> to vector<16x8xf32>
    %21 = vector.shape_cast %20 : vector<16x8xf32> to vector<2x8x8xf32>
    %22 = vector.extract_strided_slice %19 {offsets = [0, 8], sizes = [16, 8], strides = [1, 1]} : vector<16x96xf32> to vector<16x8xf32>
    %23 = vector.shape_cast %22 : vector<16x8xf32> to vector<2x8x8xf32>
    %24 = vector.extract_strided_slice %19 {offsets = [0, 16], sizes = [16, 8], strides = [1, 1]} : vector<16x96xf32> to vector<16x8xf32>
    %25 = vector.shape_cast %24 : vector<16x8xf32> to vector<2x8x8xf32>
    %26 = vector.extract_strided_slice %19 {offsets = [0, 24], sizes = [16, 8], strides = [1, 1]} : vector<16x96xf32> to vector<16x8xf32>
    %27 = vector.shape_cast %26 : vector<16x8xf32> to vector<2x8x8xf32>
    %28 = tpu.concatenate %21, %23, %25, %27 in 0 : vector<2x8x8xf32>, vector<2x8x8xf32>, vector<2x8x8xf32>, vector<2x8x8xf32> -> vector<8x8x8xf32>
    %29 = vector.extract_strided_slice %19 {offsets = [0, 32], sizes = [16, 8], strides = [1, 1]} : vector<16x96xf32> to vector<16x8xf32>
    %30 = vector.shape_cast %29 : vector<16x8xf32> to vector<2x8x8xf32>
    %31 = vector.extract_strided_slice %19 {offsets = [0, 40], sizes = [16, 8], strides = [1, 1]} : vector<16x96xf32> to vector<16x8xf32>
    %32 = vector.shape_cast %31 : vector<16x8xf32> to vector<2x8x8xf32>
    %33 = vector.extract_strided_slice %19 {offsets = [0, 48], sizes = [16, 8], strides = [1, 1]} : vector<16x96xf32> to vector<16x8xf32>
    %34 = vector.shape_cast %33 : vector<16x8xf32> to vector<2x8x8xf32>
    %35 = vector.extract_strided_slice %19 {offsets = [0, 56], sizes = [16, 8], strides = [1, 1]} : vector<16x96xf32> to vector<16x8xf32>
    %36 = vector.shape_cast %35 : vector<16x8xf32> to vector<2x8x8xf32>
    %37 = tpu.concatenate %30, %32, %34, %36 in 0 : vector<2x8x8xf32>, vector<2x8x8xf32>, vector<2x8x8xf32>, vector<2x8x8xf32> -> vector<8x8x8xf32>
    %38 = vector.extract_strided_slice %19 {offsets = [0, 64], sizes = [16, 8], strides = [1, 1]} : vector<16x96xf32> to vector<16x8xf32>
    %39 = vector.shape_cast %38 : vector<16x8xf32> to vector<2x8x8xf32>
    %40 = vector.extract_strided_slice %19 {offsets = [0, 72], sizes = [16, 8], strides = [1, 1]} : vector<16x96xf32> to vector<16x8xf32>
    %41 = vector.shape_cast %40 : vector<16x8xf32> to vector<2x8x8xf32>
    %42 = vector.extract_strided_slice %19 {offsets = [0, 80], sizes = [16, 8], strides = [1, 1]} : vector<16x96xf32> to vector<16x8xf32>
    %43 = vector.shape_cast %42 : vector<16x8xf32> to vector<2x8x8xf32>
    %44 = vector.extract_strided_slice %19 {offsets = [0, 88], sizes = [16, 8], strides = [1, 1]} : vector<16x96xf32> to vector<16x8xf32>
    %45 = vector.shape_cast %44 : vector<16x8xf32> to vector<2x8x8xf32>
    %46 = tpu.concatenate %39, %41, %43, %45 in 0 : vector<2x8x8xf32>, vector<2x8x8xf32>, vector<2x8x8xf32>, vector<2x8x8xf32> -> vector<8x8x8xf32>
    "tpu.trace_start"() <{level = 10 : i32, message = "bqd,bkd->bqk"}> : () -> ()
    %cst_11 = arith.constant dense<0.000000e+00> : vector<8x8x8xf32>
    %47 = tpu.matmul %28, %37, %cst_11 {dimension_numbers = #tpu.dot_dimension_numbers<[2], [2], [1], [1], [0, 0, 0, 1, 1, 1], [0], [0]>} : vector<8x8x8xf32>, vector<8x8x8xf32>, vector<8x8x8xf32> -> vector<8x8x8xf32>
    "tpu.trace_stop"() : () -> ()
    %48 = vector.shape_cast %47 : vector<8x8x8xf32> to vector<4x2x8x8xf32>
    %49 = vector.shape_cast %4 : vector<2x8x8xf32> to vector<1x2x8x8xf32>
    %50 = vector.broadcast %49 : vector<1x2x8x8xf32> to vector<4x2x8x8xf32>
    %51 = arith.addf %48, %50 : vector<4x2x8x8xf32>
    %52 = vector.shape_cast %51 : vector<4x2x8x8xf32> to vector<8x8x8xf32>
    %cst_12 = arith.constant dense<0xFF800000> : vector<8x8xf32>
    %53 = vector.multi_reduction <maximumf>, %52, %cst_12 [2] : vector<8x8x8xf32> to vector<8x8xf32>
    %54 = vector.shape_cast %53 : vector<8x8xf32> to vector<8x8x1xf32>
    %55 = vector.broadcast %54 : vector<8x8x1xf32> to vector<8x8x8xf32>
    %56 = arith.subf %52, %55 : vector<8x8x8xf32>
    %57 = math.exp %56 : vector<8x8x8xf32>
    %cst_13 = arith.constant dense<0.000000e+00> : vector<8x8xf32>
    %58 = vector.multi_reduction <add>, %57, %cst_13 [2] : vector<8x8x8xf32> to vector<8x8xf32>
    %59 = vector.shape_cast %58 : vector<8x8xf32> to vector<8x8x1xf32>
    %60 = vector.broadcast %59 : vector<8x8x1xf32> to vector<8x8x8xf32>
    %61 = arith.divf %57, %60 : vector<8x8x8xf32>
    "tpu.trace_start"() <{level = 10 : i32, message = "bqk,bkd->bqd"}> : () -> ()
    %cst_14 = arith.constant dense<0.000000e+00> : vector<8x8x8xf32>
    %62 = tpu.matmul %61, %46, %cst_14 {dimension_numbers = #tpu.dot_dimension_numbers<[2], [1], [1], [2], [0, 0, 0, 1, 1, 2], [0], [0]>} : vector<8x8x8xf32>, vector<8x8x8xf32>, vector<8x8x8xf32> -> vector<8x8x8xf32>
    "tpu.trace_stop"() : () -> ()
    %63 = vector.shape_cast %62 : vector<8x8x8xf32> to vector<4x16x8xf32>
    %c0_15 = arith.constant 0 : index
    %c0_16 = arith.constant 0 : index
    %c0_17 = arith.constant 0 : index
    %c0_18 = arith.constant 0 : index
    %64 = vector.load %arg4[%c0_15, %c0_16, %c0_17, %c0_18] : memref<1x4x8x32xf32, #tpu.memory_space<vmem>>, vector<1x4x8x32xf32>
    %65 = vector.shape_cast %64 : vector<1x4x8x32xf32> to vector<4x8x32xf32>
    "tpu.trace_start"() <{level = 10 : i32, message = "hrd,hde->hre"}> : () -> ()
    %cst_19 = arith.constant dense<0.000000e+00> : vector<4x16x32xf32>
    %66 = tpu.matmul %63, %65, %cst_19 {dimension_numbers = #tpu.dot_dimension_numbers<[2], [1], [1], [2], [0, 0, 0, 1, 1, 2], [0], [0]>} : vector<4x16x8xf32>, vector<4x8x32xf32>, vector<4x16x32xf32> -> vector<4x16x32xf32>
    "tpu.trace_stop"() : () -> ()
    %cst_20 = arith.constant dense<0.000000e+00> : vector<16x32xf32>
    %67 = vector.multi_reduction <add>, %66, %cst_20 [0] : vector<4x16x32xf32> to vector<16x32xf32>
    %68 = vector.broadcast %9 : vector<1x32xf32> to vector<16x32xf32>
    %69 = arith.addf %67, %68 : vector<16x32xf32>
    %70 = arith.addf %3, %69 : vector<16x32xf32>
    %cst_21 = arith.constant dense<0.000000e+00> : vector<16xf32>
    %71 = vector.multi_reduction <add>, %70, %cst_21 [1] : vector<16x32xf32> to vector<16xf32>
    %72 = vector.shape_cast %71 : vector<16xf32> to vector<16x1xf32>
    %cst_22 = arith.constant 3.200000e+01 : f32
    %73 = vector.broadcast %cst_22 : f32 to vector<16x1xf32>
    %74 = arith.divf %72, %73 : vector<16x1xf32>
    %75 = vector.broadcast %74 : vector<16x1xf32> to vector<16x32xf32>
    %76 = arith.subf %70, %75 : vector<16x32xf32>
    %77 = arith.mulf %76, %76 : vector<16x32xf32>
    %cst_23 = arith.constant dense<0.000000e+00> : vector<16xf32>
    %78 = vector.multi_reduction <add>, %77, %cst_23 [1] : vector<16x32xf32> to vector<16xf32>
    %79 = vector.shape_cast %78 : vector<16xf32> to vector<16x1xf32>
    %cst_24 = arith.constant 3.200000e+01 : f32
    %80 = vector.broadcast %cst_24 : f32 to vector<16x1xf32>
    %81 = arith.divf %79, %80 : vector<16x1xf32>
    %82 = vector.broadcast %74 : vector<16x1xf32> to vector<16x32xf32>
    %83 = arith.subf %70, %82 : vector<16x32xf32>
    %cst_25 = arith.constant 9.99999974E-6 : f32
    %84 = vector.broadcast %cst_25 : f32 to vector<16x1xf32>
    %85 = arith.addf %81, %84 : vector<16x1xf32>
    %86 = math.rsqrt %85 : vector<16x1xf32>
    %87 = vector.broadcast %86 : vector<16x1xf32> to vector<16x32xf32>
    %88 = arith.mulf %83, %87 : vector<16x32xf32>
    %89 = vector.broadcast %10 : vector<1x32xf32> to vector<16x32xf32>
    %90 = arith.mulf %88, %89 : vector<16x32xf32>
    %91 = vector.broadcast %11 : vector<1x32xf32> to vector<16x32xf32>
    %92 = arith.addf %90, %91 : vector<16x32xf32>
    %c0_26 = arith.constant 0 : index
    %c0_27 = arith.constant 0 : index
    %c0_28 = arith.constant 0 : index
    %93 = vector.load %arg5[%c0_26, %c0_27, %c0_28] : memref<1x32x64xf32, #tpu.memory_space<vmem>>, vector<1x32x64xf32>
    %94 = vector.shape_cast %93 : vector<1x32x64xf32> to vector<32x64xf32>
    %cst_29 = arith.constant dense<0.000000e+00> : vector<16x64xf32>
    %95 = tpu.matmul %92, %94, %cst_29 {dimension_numbers = #tpu.dot_dimension_numbers<[1], [0], [0], [1], [0, 0, 1, 1], [], []>} : vector<16x32xf32>, vector<32x64xf32>, vector<16x64xf32> -> vector<16x64xf32>
    %96 = vector.broadcast %8 : vector<1x64xf32> to vector<16x64xf32>
    %97 = arith.addf %95, %96 : vector<16x64xf32>
    %cst_30 = arith.constant 5.000000e-01 : f32
    %98 = vector.broadcast %cst_30 : f32 to vector<16x64xf32>
    %99 = arith.mulf %98, %97 : vector<16x64xf32>
    %cst_31 = arith.constant 1.41421354 : f32
    %100 = vector.broadcast %cst_31 : f32 to vector<16x64xf32>
    %101 = arith.divf %97, %100 : vector<16x64xf32>
    %102 = math.erf %101 : vector<16x64xf32>
    %cst_32 = arith.constant 1.000000e+00 : f32
    %103 = vector.broadcast %cst_32 : f32 to vector<16x64xf32>
    %104 = arith.addf %103, %102 : vector<16x64xf32>
    %105 = arith.mulf %99, %104 : vector<16x64xf32>
    %c0_33 = arith.constant 0 : index
    %c0_34 = arith.constant 0 : index
    %c0_35 = arith.constant 0 : index
    %106 = vector.load %arg6[%c0_33, %c0_34, %c0_35] : memref<1x64x32xf32, #tpu.memory_space<vmem>>, vector<1x64x32xf32>
    %107 = vector.shape_cast %106 : vector<1x64x32xf32> to vector<64x32xf32>
    %cst_36 = arith.constant dense<0.000000e+00> : vector<16x32xf32>
    %108 = tpu.matmul %105, %107, %cst_36 {dimension_numbers = #tpu.dot_dimension_numbers<[1], [0], [0], [1], [0, 0, 1, 1], [], []>} : vector<16x64xf32>, vector<64x32xf32>, vector<16x32xf32> -> vector<16x32xf32>
    %109 = vector.broadcast %12 : vector<1x32xf32> to vector<16x32xf32>
    %110 = arith.addf %108, %109 : vector<16x32xf32>
    %111 = arith.addf %92, %110 : vector<16x32xf32>
    %cst_37 = arith.constant dense<0.000000e+00> : vector<16xf32>
    %112 = vector.multi_reduction <add>, %111, %cst_37 [1] : vector<16x32xf32> to vector<16xf32>
    %113 = vector.shape_cast %112 : vector<16xf32> to vector<16x1xf32>
    %cst_38 = arith.constant 3.200000e+01 : f32
    %114 = vector.broadcast %cst_38 : f32 to vector<16x1xf32>
    %115 = arith.divf %113, %114 : vector<16x1xf32>
    %116 = vector.broadcast %115 : vector<16x1xf32> to vector<16x32xf32>
    %117 = arith.subf %111, %116 : vector<16x32xf32>
    %118 = arith.mulf %117, %117 : vector<16x32xf32>
    %cst_39 = arith.constant dense<0.000000e+00> : vector<16xf32>
    %119 = vector.multi_reduction <add>, %118, %cst_39 [1] : vector<16x32xf32> to vector<16xf32>
    %120 = vector.shape_cast %119 : vector<16xf32> to vector<16x1xf32>
    %cst_40 = arith.constant 3.200000e+01 : f32
    %121 = vector.broadcast %cst_40 : f32 to vector<16x1xf32>
    %122 = arith.divf %120, %121 : vector<16x1xf32>
    %123 = vector.broadcast %115 : vector<16x1xf32> to vector<16x32xf32>
    %124 = arith.subf %111, %123 : vector<16x32xf32>
    %cst_41 = arith.constant 9.99999974E-6 : f32
    %125 = vector.broadcast %cst_41 : f32 to vector<16x1xf32>
    %126 = arith.addf %122, %125 : vector<16x1xf32>
    %127 = math.rsqrt %126 : vector<16x1xf32>
    %128 = vector.broadcast %127 : vector<16x1xf32> to vector<16x32xf32>
    %129 = arith.mulf %124, %128 : vector<16x32xf32>
    %130 = vector.broadcast %13 : vector<1x32xf32> to vector<16x32xf32>
    %131 = arith.mulf %129, %130 : vector<16x32xf32>
    %132 = vector.broadcast %14 : vector<1x32xf32> to vector<16x32xf32>
    %133 = arith.addf %131, %132 : vector<16x32xf32>
    %c0_42 = arith.constant 0 : index
    %c0_43 = arith.constant 0 : index
    %134 = vector.load %arg8[%c0_42, %c0_43] : memref<16x32xf32, #tpu.memory_space<vmem>>, vector<16x32xf32>
    tpu.vector_store %arg8[%c0_42, %c0_43], %133 {strides = array<i32>} : memref<16x32xf32, #tpu.memory_space<vmem>>, vector<16x32xf32>,
    return
  }
  func.func @transform_0(%arg0: i32) -> (i32, i32) {
    %c0_i32 = arith.constant 0 : i32
    %c0_i32_0 = arith.constant 0 : i32
    %c0_i32_1 = arith.constant 0 : i32
    return %c0_i32, %c0_i32_0 : i32, i32
  }
  func.func @transform_1(%arg0: i32) -> (i32, i32, i32) {
    %c0_i32 = arith.constant 0 : i32
    %c0_i32_0 = arith.constant 0 : i32
    %c0_i32_1 = arith.constant 0 : i32
    %c0_i32_2 = arith.constant 0 : i32
    return %c0_i32, %c0_i32_0, %c0_i32_1 : i32, i32, i32
  }
  func.func @transform_2(%arg0: i32) -> (i32, i32, i32) {
    %c0_i32 = arith.constant 0 : i32
    %c0_i32_0 = arith.constant 0 : i32
    %c0_i32_1 = arith.constant 0 : i32
    return %arg0, %c0_i32, %c0_i32_0 : i32, i32, i32
  }
  func.func @transform_3(%arg0: i32) -> (i32, i32, i32, i32) {
    %c0_i32 = arith.constant 0 : i32
    %c0_i32_0 = arith.constant 0 : i32
    %c0_i32_1 = arith.constant 0 : i32
    %c0_i32_2 = arith.constant 0 : i32
    return %arg0, %c0_i32, %c0_i32_0, %c0_i32_1 : i32, i32, i32, i32
  }
  func.func @transform_4(%arg0: i32) -> (i32, i32, i32) {
    %c0_i32 = arith.constant 0 : i32
    %c0_i32_0 = arith.constant 0 : i32
    %c0_i32_1 = arith.constant 0 : i32
    return %arg0, %c0_i32, %c0_i32_0 : i32, i32, i32
  }
  func.func @transform_5(%arg0: i32) -> (i32, i32, i32) {
    %c0_i32 = arith.constant 0 : i32
    %c0_i32_0 = arith.constant 0 : i32
    %c0_i32_1 = arith.constant 0 : i32
    return %arg0, %c0_i32, %c0_i32_0 : i32, i32, i32
  }
  func.func @transform_6(%arg0: i32) -> (i32, i32, i32) {
    %c0_i32 = arith.constant 0 : i32
    %c0_i32_0 = arith.constant 0 : i32
    %c0_i32_1 = arith.constant 0 : i32
    return %arg0, %c0_i32, %c0_i32_0 : i32, i32, i32
  }
  func.func @transform_7(%arg0: i32) -> (i32, i32) {
    %c0_i32 = arith.constant 0 : i32
    %c0_i32_0 = arith.constant 0 : i32
    %c0_i32_1 = arith.constant 0 : i32
    return %c0_i32, %c0_i32_0 : i32, i32
  }
}

</mosaic_0001>

<llo_original>
// kernel: tpu_custom_call.1
$region0: #{tpu_custom_call.1}
  #allocation0 [shape = 'u32[]', space=smem, size = 0x4, offset = 0x4, fixed_abs, tag = 'smem constant byte address 0x4 - core index']
  #allocation1 [shape = 'u32[144,128]{1,0:T(1,128)}', space=vmem, size = 0x12000, scoped, tag = 'internal scratch']
  %s0 = inlined_call_operand.hbm [shape: f32[16,32], index: 0, kind: input, shape index: {}]
  %s1 = inlined_call_operand.hbm [shape: f32[2,8,8], index: 1, kind: input, shape index: {}]
  %s2 = inlined_call_operand.vmem [shape: f32[1,32,96], index: 2, kind: input, shape index: {}]
  %s3 = inlined_call_operand.vmem [shape: f32[1,4,8,32], index: 3, kind: input, shape index: {}]
  %s4 = inlined_call_operand.vmem [shape: f32[1,32,64], index: 4, kind: input, shape index: {}]
  %s5 = inlined_call_operand.vmem [shape: f32[1,64,32], index: 5, kind: input, shape index: {}]
  %s6 = inlined_call_operand.vmem [shape: f32[1,8,96], index: 6, kind: input, shape index: {}]
  %s7 = inlined_call_operand.hbm [shape: f32[16,32], index: 7, kind: output, shape index: {}]
  %s8 = sld [smem:[#allocation0]]
  $region50: #{tpu_custom_call.1} parent=0
    _
  %s10 = ssub.s32 1, %s8
  %s11 = scalar_select 0, %s10, %s8
  $region1: #{tpu_custom_call.1} parent=0
    #allocation2 [shape = 'u8[8192]{0}', space=vmem, size = 0x2000, scoped, tag = 'input window, operand 0, single buffered']
    #allocation3 [shape = 's32[1]{0}', space=sflag, size = 0x4, scoped, tag = 'scoped memory for tpu_custom_call.1']
    #allocation4 [shape = 's32[1]{0}', space=sflag, size = 0x4, scoped, tag = 'scoped memory for tpu_custom_call.1']
    #allocation5 [shape = 'u8[8192]{0}', space=vmem, size = 0x2000, scoped, tag = 'input window, operand 1, single buffered']
    #allocation6 [shape = 's32[1]{0}', space=sflag, size = 0x4, scoped, tag = 'scoped memory for tpu_custom_call.1']
    #allocation7 [shape = 'u8[8192]{0}', space=vmem, size = 0x2000, scoped, tag = 'output window, operand 0, single buffered']
    %12 = vsyncpa [#allocation3], 0
    %13 = vsyncpa [#allocation6], 0
    %14 = vsyncpa [#allocation4], 0
    // Predicated region
    $region2: #{tpu_custom_call.1} parent=1 // pred_check
      _
    $region3: #{tpu_custom_call.1} parent=1 // pred_check_branch
      %16 = sbr.rel (0) target = $region5
    $region4: #{tpu_custom_call.1} parent=1 // pred_region
      %s18 = ssub.s32 256, 256
      %19 = vsyncadd [#allocation3], %s18
      %s20 = sshll.u32 [#allocation2], 4
      %s21 = int_to_ptr.vmem [resolvable:$true] %s20
      %26 = dma.hbm_to_vmem [thread:$0]  %s0, 256, %s21, [#allocation3], 128, 128, 8
    $region5: #{tpu_custom_call.1} parent=1 // pred_fallthru
      _
    // Predicated region
    $region6: #{tpu_custom_call.1} parent=1 // pred_check
      _
    $region7: #{tpu_custom_call.1} parent=1 // pred_check_branch
      %28 = sbr.rel (0) target = $region9
    $region8: #{tpu_custom_call.1} parent=1 // pred_region
      %s30 = ssub.s32 256, 256
      %31 = vsyncadd [#allocation6], %s30
      %s32 = sshll.u32 [#allocation5], 4
      %s33 = int_to_ptr.vmem [resolvable:$true] %s32
      %38 = dma.hbm_to_vmem [thread:$0]  %s1, 256, %s33, [#allocation6], 128, 128, 8
    $region9: #{tpu_custom_call.1} parent=1 // pred_fallthru
      _
    // Predicated region
    $region10: #{tpu_custom_call.1} parent=1 // pred_check
      _
    $region11: #{tpu_custom_call.1} parent=1 // pred_check_branch
      %40 = sbr.rel (0) target = $region13
    $region12: #{tpu_custom_call.1} parent=1 // pred_region
      _
    $region13: #{tpu_custom_call.1} parent=1 // pred_fallthru
      _
    // Predicated region
    $region14: #{tpu_custom_call.1} parent=1 // pred_check
      _
    $region15: #{tpu_custom_call.1} parent=1 // pred_check_branch
      %42 = sbr.rel (0) target = $region17
    $region16: #{tpu_custom_call.1} parent=1 // pred_region
      _
    $region17: #{tpu_custom_call.1} parent=1 // pred_fallthru
      _
    // Predicated region
    $region18: #{tpu_custom_call.1} parent=1 // pred_check
      _
    $region19: #{tpu_custom_call.1} parent=1 // pred_check_branch
      %44 = sbr.rel (0) target = $region21
    $region20: #{tpu_custom_call.1} parent=1 // pred_region
      _
    $region21: #{tpu_custom_call.1} parent=1 // pred_fallthru
      _
    // Predicated region
    $region22: #{tpu_custom_call.1} parent=1 // pred_check
      _
    $region23: #{tpu_custom_call.1} parent=1 // pred_check_branch
      %46 = sbr.rel (0) target = $region25
    $region24: #{tpu_custom_call.1} parent=1 // pred_region
      _
    $region25: #{tpu_custom_call.1} parent=1 // pred_fallthru
      _
    // Predicated region
    $region26: #{tpu_custom_call.1} parent=1 // pred_check
      _
    $region27: #{tpu_custom_call.1} parent=1 // pred_check_branch
      %48 = sbr.rel (0) target = $region29
    $region28: #{tpu_custom_call.1} parent=1 // pred_region
      _
    $region29: #{tpu_custom_call.1} parent=1 // pred_fallthru
      _
    // Predicated region
    $region30: #{tpu_custom_call.1} parent=1 // pred_check
      _
    $region31: #{tpu_custom_call.1} parent=1 // pred_check_branch
      %50 = sbr.rel (0) target = $region33
    $region32: #{tpu_custom_call.1} parent=1 // pred_region
      %51 = dma.done [#allocation3], 256
    $region33: #{tpu_custom_call.1} parent=1 // pred_fallthru
      _
    // Predicated region
    $region34: #{tpu_custom_call.1} parent=1 // pred_check
      _
    $region35: #{tpu_custom_call.1} parent=1 // pred_check_branch
      %53 = sbr.rel (0) target = $region37
    $region36: #{tpu_custom_call.1} parent=1 // pred_region
      %54 = dma.done [#allocation6], 256
    $region37: #{tpu_custom_call.1} parent=1 // pred_fallthru
      _
    %p55 = scmp.eq.s32.totalorder 0, 0
    // Predicated region
    $region38: #{tpu_custom_call.1} parent=1 // pred_check
      %p56 = pneg %p55
    $region39: #{tpu_custom_call.1} parent=1 // pred_check_branch
      %58 = sbr.rel (%p56) target = $region41
    $region40: #{tpu_custom_call.1} parent=1 // pred_region
      %v59 = vld [vmem:[#allocation2] sm:$0xff]
      %v60 = vld [vmem:[#allocation2 + $0x8] sm:$0xff]
      %vm61 = vcmask 261120
      %62 = vst.msk [vmem:[#allocation7] sm:$0xff] %vm61, %v59
      %63 = vst.msk [vmem:[#allocation7 + $0x8] sm:$0xff] %vm61, %v60
    $region41: #{tpu_custom_call.1} parent=1 // pred_fallthru
      _
    %v64 = vld [vmem:[#allocation7] sm:$0xff]
    %v65 = vld [vmem:[#allocation7 + $0x8] sm:$0xff]
    %v66 = vld [vmem:[#allocation5] sm:$0xff]
    %v67 = vld [vmem:[#allocation5 + $0x8] sm:$0xff]
    %v68 = vld [vmem:[%s6] sm:$0xff]
    %v69 = vld [vmem:[%s2] sm:$0xff]
    %v70 = vld [vmem:[%s2 + $0x8] sm:$0xff]
    %v71 = vld [vmem:[%s2 + $0x10] sm:$0xff]
    %v72 = vld [vmem:[%s2 + $0x18] sm:$0xff]
    %v73 = vlaneseq
    %v74 = vshrl.u32 %v73, 7
    %v75 = vsub.s32 0, %v74
    %v76 = vrot.slane %v68, %v75
    %vm77 = vcmask 261120
    %v79 = vsel %vm77, %v64, 0
    %v82 = vsel %vm77, %v65, 0
    %84 = vmatprep.subr.mxu0 0.0
    %85 = vmatpush1.msra.mxu0 %v69
    %86 = vmatprep.subr.mxu0 0.0
    %87 = vmatpush1.msra.mxu0 %v70
    %88 = vmatprep.subr.mxu0 0.0
    %89 = vmatpush1.msra.mxu0 %v71
    %90 = vmatprep.subr.mxu0 0.0
    %91 = vmatpush1.msra.mxu0 %v72
    %92 = vmatprep.subr.mxu0 0.0
    %93 = vmatpush1.msra.mxu0 0.0
    %94 = vmatprep.subr.mxu0 0.0
    %95 = vmatpush1.msra.mxu0 0.0
    %96 = vmatprep.subr.mxu0 0.0
    %97 = vmatpush1.msra.mxu0 0.0
    %98 = vmatprep.subr.mxu0 0.0
    %99 = vmatpush1.msra.mxu0 0.0
    %100 = vmatprep.subr.mxu0 0.0
    %101 = vmatpush1.msra.mxu0 0.0
    %102 = vmatprep.subr.mxu0 0.0
    %103 = vmatpush1.msra.mxu0 0.0
    %104 = vmatprep.subr.mxu0 0.0
    %105 = vmatpush1.msra.mxu0 0.0
    %106 = vmatprep.subr.mxu0 0.0
    %107 = vmatpush1.msra.mxu0 0.0
    %108 = vmatprep.subr.mxu0 0.0
    %109 = vmatpush1.msra.mxu0 0.0
    %110 = vmatprep.subr.mxu0 0.0
    %111 = vmatpush1.msra.mxu0 0.0
    %112 = vmatprep.subr.mxu0 0.0
    %113 = vmatpush1.msra.mxu0 0.0
    %114 = vmatprep.subr.mxu0 0.0
    %115 = vmatpush1.msra.mxu0 0.0
    %116 = vmatprep.subr.mxu0 0.0
    %117 = vmatpush1.msra.mxu0 0.0
    %118 = vmatprep.subr.mxu0 0.0
    %119 = vmatpush1.msra.mxu0 0.0
    %120 = vmatprep.subr.mxu0 0.0
    %121 = vmatpush1.msra.mxu0 0.0
    %122 = vmatprep.subr.mxu0 0.0
    %123 = vmatpush1.msra.mxu0 0.0
    %124 = vmatprep.subr.mxu0 0.0
    %125 = vmatpush1.msra.mxu0 0.0
    %126 = vmatprep.subr.mxu0 0.0
    %127 = vmatpush1.msra.mxu0 0.0
    %128 = vmatprep.subr.mxu0 0.0
    %129 = vmatpush1.msra.mxu0 0.0
    %130 = vmatprep.subr.mxu0 0.0
    %131 = vmatpush1.msra.mxu0 0.0
    %132 = vmatprep.subr.mxu0 0.0
    %133 = vmatpush1.msra.mxu0 0.0
    %134 = vmatprep.subr.mxu0 0.0
    %135 = vmatpush1.msra.mxu0 0.0
    %136 = vmatprep.subr.mxu0 0.0
    %137 = vmatpush1.msra.mxu0 0.0
    %138 = vmatprep.subr.mxu0 0.0
    %139 = vmatpush1.msra.mxu0 0.0
    %140 = vmatprep.subr.mxu0 0.0
    %141 = vmatpush1.msra.mxu0 0.0
    %142 = vmatprep.subr.mxu0 0.0
    %143 = vmatpush1.msra.mxu0 0.0
    %144 = vmatprep.subr.mxu0 0.0
    %145 = vmatpush1.msra.mxu0 0.0
    %146 = vmatprep.subr.mxu0 0.0
    %147 = vmatpush1.msra.mxu0 0.0
    %148 = vmatprep.mubr.f32.mxu0 0.0
    %149 = vmatmul.mubr.f32.gmra.mrb[0].mxu0 %v79
    %v150 = vpop.f32.mrb[0].mxu0
    %v151 = vadd.f32 %v76, %v150
    %v152 = vpop.f32.mrb[0].mxu0
    %153 = vmatprep.mubr.f32.mxu0 0.0
    %154 = vmatmul.mubr.f32.gmra.mrb[0].mxu0 %v82
    %v155 = vpop.f32.mrb[0].mxu0
    %v156 = vadd.f32 %v76, %v155
    %v157 = vpop.f32.mrb[0].mxu0
    %158 = vdwg.mxu0
    %161 = vrot.lane.b32.xlu0 %v151, 120
    %v162 = vpop.permute.xlu0 %161
    %163 = vrot.lane.b32.xlu0 %v156, 120
    %v164 = vpop.permute.xlu0 %163
    %165 = vrot.lane.b32.xlu0 %v151, 112
    %v166 = vpop.permute.xlu0 %165
    %167 = vrot.lane.b32.xlu0 %v156, 112
    %v168 = vpop.permute.xlu0 %167
    %169 = vrot.lane.b32.xlu0 %v151, 104
    %v170 = vpop.permute.xlu0 %169
    %171 = vrot.lane.b32.xlu0 %v156, 104
    %v172 = vpop.permute.xlu0 %171
    %173 = vrot.lane.b32.xlu0 %v151, 96
    %v174 = vpop.permute.xlu0 %173
    %vm175 = vcmask 64512
    %v176 = vsel %vm175, %v151, 0
    %v178 = vsel %vm175, %v174, 0
    %180 = vmatprep.subr.mxu0 0.0
    %181 = vmatpush1.xpose.msra.mxu0 %v178
    %182 = vmatprep.subr.mxu0 0.0
    %183 = vmatpush1.xpose.msra.mxu0 0.0
    %184 = vmatprep.subr.mxu0 0.0
    %185 = vmatpush1.xpose.msra.mxu0 0.0
    %186 = vmatprep.subr.mxu0 0.0
    %187 = vmatpush1.xpose.msra.mxu0 0.0
    %188 = vmatprep.subr.mxu0 0.0
    %189 = vmatpush1.xpose.msra.mxu0 0.0
    %190 = vmatprep.subr.mxu0 0.0
    %191 = vmatpush1.xpose.msra.mxu0 0.0
    %192 = vmatprep.subr.mxu0 0.0
    %193 = vmatpush1.xpose.msra.mxu0 0.0
    %194 = vmatprep.subr.mxu0 0.0
    %195 = vmatpush1.xpose.msra.mxu0 0.0
    %196 = vmatprep.subr.mxu0 0.0
    %197 = vmatpush1.xpose.msra.mxu0 0.0
    %198 = vmatprep.subr.mxu0 0.0
    %199 = vmatpush1.xpose.msra.mxu0 0.0
    %200 = vmatprep.subr.mxu0 0.0
    %201 = vmatpush1.xpose.msra.mxu0 0.0
    %202 = vmatprep.subr.mxu0 0.0
    %203 = vmatpush1.xpose.msra.mxu0 0.0
    %204 = vmatprep.subr.mxu0 0.0
    %205 = vmatpush1.xpose.msra.mxu0 0.0
    %206 = vmatprep.subr.mxu0 0.0
    %207 = vmatpush1.xpose.msra.mxu0 0.0
    %208 = vmatprep.subr.mxu0 0.0
    %209 = vmatpush1.xpose.msra.mxu0 0.0
    %210 = vmatprep.subr.mxu0 0.0
    %211 = vmatpush1.xpose.msra.mxu0 0.0
    %212 = vmatprep.subr.mxu0 0.0
    %213 = vmatpush1.xpose.msra.mxu0 0.0
    %214 = vmatprep.subr.mxu0 0.0
    %215 = vmatpush1.xpose.msra.mxu0 0.0
    %216 = vmatprep.subr.mxu0 0.0
    %217 = vmatpush1.xpose.msra.mxu0 0.0
    %218 = vmatprep.subr.mxu0 0.0
    %219 = vmatpush1.xpose.msra.mxu0 0.0
    %220 = vmatprep.subr.mxu0 0.0
    %221 = vmatpush1.xpose.msra.mxu0 0.0
    %222 = vmatprep.subr.mxu0 0.0
    %223 = vmatpush1.xpose.msra.mxu0 0.0
    %224 = vmatprep.subr.mxu0 0.0
    %225 = vmatpush1.xpose.msra.mxu0 0.0
    %226 = vmatprep.subr.mxu0 0.0
    %227 = vmatpush1.xpose.msra.mxu0 0.0
    %228 = vmatprep.subr.mxu0 0.0
    %229 = vmatpush1.xpose.msra.mxu0 0.0
    %230 = vmatprep.subr.mxu0 0.0
    %231 = vmatpush1.xpose.msra.mxu0 0.0
    %232 = vmatprep.subr.mxu0 0.0
    %233 = vmatpush1.xpose.msra.mxu0 0.0
    %234 = vmatprep.subr.mxu0 0.0
    %235 = vmatpush1.xpose.msra.mxu0 0.0
    %236 = vmatprep.subr.mxu0 0.0
    %237 = vmatpush1.xpose.msra.mxu0 0.0
    %238 = vmatprep.subr.mxu0 0.0
    %239 = vmatpush1.xpose.msra.mxu0 0.0
    %240 = vmatprep.subr.mxu0 0.0
    %241 = vmatpush1.xpose.msra.mxu0 0.0
    %242 = vmatprep.subr.mxu0 0.0
    %243 = vmatpush1.xpose.msra.mxu0 0.0
    %244 = vmatprep.mubr.f32.mxu0 0.0
    %245 = vmatmul.mubr.f32.gmra.mrb[0].mxu0 %v176
    %v246 = vpop.f32.mrb[0].mxu0
    %v247 = vadd.f32 0.0, %v246
    %v248 = vpop.f32.mrb[0].mxu0
    %249 = vdwg.mxu0
    %250 = vrot.lane.b32.xlu0 %v156, 96
    %v251 = vpop.permute.xlu0 %250
    %v252 = vsel %vm175, %v156, 0
    %v254 = vsel %vm175, %v251, 0
    %256 = vmatprep.subr.mxu0 0.0
    %257 = vmatpush1.xpose.msra.mxu0 %v254
    %258 = vmatprep.subr.mxu0 0.0
    %259 = vmatpush1.xpose.msra.mxu0 0.0
    %260 = vmatprep.subr.mxu0 0.0
    %261 = vmatpush1.xpose.msra.mxu0 0.0
    %262 = vmatprep.subr.mxu0 0.0
    %263 = vmatpush1.xpose.msra.mxu0 0.0
    %264 = vmatprep.subr.mxu0 0.0
    %265 = vmatpush1.xpose.msra.mxu0 0.0
    %266 = vmatprep.subr.mxu0 0.0
    %267 = vmatpush1.xpose.msra.mxu0 0.0
    %268 = vmatprep.subr.mxu0 0.0
    %269 = vmatpush1.xpose.msra.mxu0 0.0
    %270 = vmatprep.subr.mxu0 0.0
    %271 = vmatpush1.xpose.msra.mxu0 0.0
    %272 = vmatprep.subr.mxu0 0.0
    %273 = vmatpush1.xpose.msra.mxu0 0.0
    %274 = vmatprep.subr.mxu0 0.0
    %275 = vmatpush1.xpose.msra.mxu0 0.0
    %276 = vmatprep.subr.mxu0 0.0
    %277 = vmatpush1.xpose.msra.mxu0 0.0
    %278 = vmatprep.subr.mxu0 0.0
    %279 = vmatpush1.xpose.msra.mxu0 0.0
    %280 = vmatprep.subr.mxu0 0.0
    %281 = vmatpush1.xpose.msra.mxu0 0.0
    %282 = vmatprep.subr.mxu0 0.0
    %283 = vmatpush1.xpose.msra.mxu0 0.0
    %284 = vmatprep.subr.mxu0 0.0
    %285 = vmatpush1.xpose.msra.mxu0 0.0
    %286 = vmatprep.subr.mxu0 0.0
    %287 = vmatpush1.xpose.msra.mxu0 0.0
    %288 = vmatprep.subr.mxu0 0.0
    %289 = vmatpush1.xpose.msra.mxu0 0.0
    %290 = vmatprep.subr.mxu0 0.0
    %291 = vmatpush1.xpose.msra.mxu0 0.0
    %292 = vmatprep.subr.mxu0 0.0
    %293 = vmatpush1.xpose.msra.mxu0 0.0
    %294 = vmatprep.subr.mxu0 0.0
    %295 = vmatpush1.xpose.msra.mxu0 0.0
    %296 = vmatprep.subr.mxu0 0.0
    %297 = vmatpush1.xpose.msra.mxu0 0.0
    %298 = vmatprep.subr.mxu0 0.0
    %299 = vmatpush1.xpose.msra.mxu0 0.0
    %300 = vmatprep.subr.mxu0 0.0
    %301 = vmatpush1.xpose.msra.mxu0 0.0
    %302 = vmatprep.subr.mxu0 0.0
    %303 = vmatpush1.xpose.msra.mxu0 0.0
    %304 = vmatprep.subr.mxu0 0.0
    %305 = vmatpush1.xpose.msra.mxu0 0.0
    %306 = vmatprep.subr.mxu0 0.0
    %307 = vmatpush1.xpose.msra.mxu0 0.0
    %308 = vmatprep.subr.mxu0 0.0
    %309 = vmatpush1.xpose.msra.mxu0 0.0
    %310 = vmatprep.subr.mxu0 0.0
    %311 = vmatpush1.xpose.msra.mxu0 0.0
    %312 = vmatprep.subr.mxu0 0.0
    %313 = vmatpush1.xpose.msra.mxu0 0.0
    %314 = vmatprep.subr.mxu0 0.0
    %315 = vmatpush1.xpose.msra.mxu0 0.0
    %316 = vmatprep.subr.mxu0 0.0
    %317 = vmatpush1.xpose.msra.mxu0 0.0
    %318 = vmatprep.subr.mxu0 0.0
    %319 = vmatpush1.xpose.msra.mxu0 0.0
    %320 = vmatprep.mubr.f32.mxu0 0.0
    %321 = vmatmul.mubr.f32.gmra.mrb[0].mxu0 %v252
    %v322 = vpop.f32.mrb[0].mxu0
    %v323 = vadd.f32 0.0, %v322
    %v324 = vpop.f32.mrb[0].mxu0
    %325 = vdwg.mxu0
    %326 = vrot.lane.b32.xlu0 %v162, 96
    %v327 = vpop.permute.xlu0 %326
    %v328 = vsel %vm175, %v162, 0
    %v330 = vsel %vm175, %v327, 0
    %332 = vmatprep.subr.mxu0 0.0
    %333 = vmatpush1.xpose.msra.mxu0 %v330
    %334 = vmatprep.subr.mxu0 0.0
    %335 = vmatpush1.xpose.msra.mxu0 0.0
    %336 = vmatprep.subr.mxu0 0.0
    %337 = vmatpush1.xpose.msra.mxu0 0.0
    %338 = vmatprep.subr.mxu0 0.0
    %339 = vmatpush1.xpose.msra.mxu0 0.0
    %340 = vmatprep.subr.mxu0 0.0
    %341 = vmatpush1.xpose.msra.mxu0 0.0
    %342 = vmatprep.subr.mxu0 0.0
    %343 = vmatpush1.xpose.msra.mxu0 0.0
    %344 = vmatprep.subr.mxu0 0.0
    %345 = vmatpush1.xpose.msra.mxu0 0.0
    %346 = vmatprep.subr.mxu0 0.0
    %347 = vmatpush1.xpose.msra.mxu0 0.0
    %348 = vmatprep.subr.mxu0 0.0
    %349 = vmatpush1.xpose.msra.mxu0 0.0
    %350 = vmatprep.subr.mxu0 0.0
    %351 = vmatpush1.xpose.msra.mxu0 0.0
    %352 = vmatprep.subr.mxu0 0.0
    %353 = vmatpush1.xpose.msra.mxu0 0.0
    %354 = vmatprep.subr.mxu0 0.0
    %355 = vmatpush1.xpose.msra.mxu0 0.0
    %356 = vmatprep.subr.mxu0 0.0
    %357 = vmatpush1.xpose.msra.mxu0 0.0
    %358 = vmatprep.subr.mxu0 0.0
    %359 = vmatpush1.xpose.msra.mxu0 0.0
    %360 = vmatprep.subr.mxu0 0.0
    %361 = vmatpush1.xpose.msra.mxu0 0.0
    %362 = vmatprep.subr.mxu0 0.0
    %363 = vmatpush1.xpose.msra.mxu0 0.0
    %364 = vmatprep.subr.mxu0 0.0
    %365 = vmatpush1.xpose.msra.mxu0 0.0
    %366 = vmatprep.subr.mxu0 0.0
    %367 = vmatpush1.xpose.msra.mxu0 0.0
    %368 = vmatprep.subr.mxu0 0.0
    %369 = vmatpush1.xpose.msra.mxu0 0.0
    %370 = vmatprep.subr.mxu0 0.0
    %371 = vmatpush1.xpose.msra.mxu0 0.0
    %372 = vmatprep.subr.mxu0 0.0
    %373 = vmatpush1.xpose.msra.mxu0 0.0
    %374 = vmatprep.subr.mxu0 0.0
    %375 = vmatpush1.xpose.msra.mxu0 0.0
    %376 = vmatprep.subr.mxu0 0.0
    %377 = vmatpush1.xpose.msra.mxu0 0.0
    %378 = vmatprep.subr.mxu0 0.0
    %379 = vmatpush1.xpose.msra.mxu0 0.0
    %380 = vmatprep.subr.mxu0 0.0
    %381 = vmatpush1.xpose.msra.mxu0 0.0
    %382 = vmatprep.subr.mxu0 0.0
    %383 = vmatpush1.xpose.msra.mxu0 0.0
    %384 = vmatprep.subr.mxu0 0.0
    %385 = vmatpush1.xpose.msra.mxu0 0.0
    %386 = vmatprep.subr.mxu0 0.0
    %387 = vmatpush1.xpose.msra.mxu0 0.0
    %388 = vmatprep.subr.mxu0 0.0
    %389 = vmatpush1.xpose.msra.mxu0 0.0
    %390 = vmatprep.subr.mxu0 0.0
    %391 = vmatpush1.xpose.msra.mxu0 0.0
    %392 = vmatprep.subr.mxu0 0.0
    %393 = vmatpush1.xpose.msra.mxu0 0.0
    %394 = vmatprep.subr.mxu0 0.0
    %395 = vmatpush1.xpose.msra.mxu0 0.0
    %396 = vmatprep.mubr.f32.mxu0 0.0
    %397 = vmatmul.mubr.f32.gmra.mrb[0].mxu0 %v328
    %v398 = vpop.f32.mrb[0].mxu0
    %v399 = vadd.f32 0.0, %v398
    %v400 = vpop.f32.mrb[0].mxu0
    %401 = vdwg.mxu0
    %402 = vrot.lane.b32.xlu0 %v164, 96
    %v403 = vpop.permute.xlu0 %402
    %v404 = vsel %vm175, %v164, 0
    %v406 = vsel %vm175, %v403, 0
    %408 = vmatprep.subr.mxu0 0.0
    %409 = vmatpush1.xpose.msra.mxu0 %v406
    %410 = vmatprep.subr.mxu0 0.0
    %411 = vmatpush1.xpose.msra.mxu0 0.0
    %412 = vmatprep.subr.mxu0 0.0
    %413 = vmatpush1.xpose.msra.mxu0 0.0
    %414 = vmatprep.subr.mxu0 0.0
    %415 = vmatpush1.xpose.msra.mxu0 0.0
    %416 = vmatprep.subr.mxu0 0.0
    %417 = vmatpush1.xpose.msra.mxu0 0.0
    %418 = vmatprep.subr.mxu0 0.0
    %419 = vmatpush1.xpose.msra.mxu0 0.0
    %420 = vmatprep.subr.mxu0 0.0
    %421 = vmatpush1.xpose.msra.mxu0 0.0
    %422 = vmatprep.subr.mxu0 0.0
    %423 = vmatpush1.xpose.msra.mxu0 0.0
    %424 = vmatprep.subr.mxu0 0.0
    %425 = vmatpush1.xpose.msra.mxu0 0.0
    %426 = vmatprep.subr.mxu0 0.0
    %427 = vmatpush1.xpose.msra.mxu0 0.0
    %428 = vmatprep.subr.mxu0 0.0
    %429 = vmatpush1.xpose.msra.mxu0 0.0
    %430 = vmatprep.subr.mxu0 0.0
    %431 = vmatpush1.xpose.msra.mxu0 0.0
    %432 = vmatprep.subr.mxu0 0.0
    %433 = vmatpush1.xpose.msra.mxu0 0.0
    %434 = vmatprep.subr.mxu0 0.0
    %435 = vmatpush1.xpose.msra.mxu0 0.0
    %436 = vmatprep.subr.mxu0 0.0
    %437 = vmatpush1.xpose.msra.mxu0 0.0
    %438 = vmatprep.subr.mxu0 0.0
    %439 = vmatpush1.xpose.msra.mxu0 0.0
    %440 = vmatprep.subr.mxu0 0.0
    %441 = vmatpush1.xpose.msra.mxu0 0.0
    %442 = vmatprep.subr.mxu0 0.0
    %443 = vmatpush1.xpose.msra.mxu0 0.0
    %444 = vmatprep.subr.mxu0 0.0
    %445 = vmatpush1.xpose.msra.mxu0 0.0
    %446 = vmatprep.subr.mxu0 0.0
    %447 = vmatpush1.xpose.msra.mxu0 0.0
    %448 = vmatprep.subr.mxu0 0.0
    %449 = vmatpush1.xpose.msra.mxu0 0.0
    %450 = vmatprep.subr.mxu0 0.0
    %451 = vmatpush1.xpose.msra.mxu0 0.0
    %452 = vmatprep.subr.mxu0 0.0
    %453 = vmatpush1.xpose.msra.mxu0 0.0
    %454 = vmatprep.subr.mxu0 0.0
    %455 = vmatpush1.xpose.msra.mxu0 0.0
    %456 = vmatprep.subr.mxu0 0.0
    %457 = vmatpush1.xpose.msra.mxu0 0.0
    %458 = vmatprep.subr.mxu0 0.0
    %459 = vmatpush1.xpose.msra.mxu0 0.0
    %460 = vmatprep.subr.mxu0 0.0
    %461 = vmatpush1.xpose.msra.mxu0 0.0
    %462 = vmatprep.subr.mxu0 0.0
    %463 = vmatpush1.xpose.msra.mxu0 0.0
    %464 = vmatprep.subr.mxu0 0.0
    %465 = vmatpush1.xpose.msra.mxu0 0.0
    %466 = vmatprep.subr.mxu0 0.0
    %467 = vmatpush1.xpose.msra.mxu0 0.0
    %468 = vmatprep.subr.mxu0 0.0
    %469 = vmatpush1.xpose.msra.mxu0 0.0
    %470 = vmatprep.subr.mxu0 0.0
    %471 = vmatpush1.xpose.msra.mxu0 0.0
    %472 = vmatprep.mubr.f32.mxu0 0.0
    %473 = vmatmul.mubr.f32.gmra.mrb[0].mxu0 %v404
    %v474 = vpop.f32.mrb[0].mxu0
    %v475 = vadd.f32 0.0, %v474
    %v476 = vpop.f32.mrb[0].mxu0
    %477 = vdwg.mxu0
    %478 = vrot.lane.b32.xlu0 %v166, 96
    %v479 = vpop.permute.xlu0 %478
    %v480 = vsel %vm175, %v166, 0
    %v482 = vsel %vm175, %v479, 0
    %484 = vmatprep.subr.mxu0 0.0
    %485 = vmatpush1.xpose.msra.mxu0 %v482
    %486 = vmatprep.subr.mxu0 0.0
    %487 = vmatpush1.xpose.msra.mxu0 0.0
    %488 = vmatprep.subr.mxu0 0.0
    %489 = vmatpush1.xpose.msra.mxu0 0.0
    %490 = vmatprep.subr.mxu0 0.0
    %491 = vmatpush1.xpose.msra.mxu0 0.0
    %492 = vmatprep.subr.mxu0 0.0
    %493 = vmatpush1.xpose.msra.mxu0 0.0
    %494 = vmatprep.subr.mxu0 0.0
    %495 = vmatpush1.xpose.msra.mxu0 0.0
    %496 = vmatprep.subr.mxu0 0.0
    %497 = vmatpush1.xpose.msra.mxu0 0.0
    %498 = vmatprep.subr.mxu0 0.0
    %499 = vmatpush1.xpose.msra.mxu0 0.0
    %500 = vmatprep.subr.mxu0 0.0
    %501 = vmatpush1.xpose.msra.mxu0 0.0
    %502 = vmatprep.subr.mxu0 0.0
    %503 = vmatpush1.xpose.msra.mxu0 0.0
    %504 = vmatprep.subr.mxu0 0.0
    %505 = vmatpush1.xpose.msra.mxu0 0.0
    %506 = vmatprep.subr.mxu0 0.0
    %507 = vmatpush1.xpose.msra.mxu0 0.0
    %508 = vmatprep.subr.mxu0 0.0
    %509 = vmatpush1.xpose.msra.mxu0 0.0
    %510 = vmatprep.subr.mxu0 0.0
    %511 = vmatpush1.xpose.msra.mxu0 0.0
    %512 = vmatprep.subr.mxu0 0.0
    %513 = vmatpush1.xpose.msra.mxu0 0.0
    %514 = vmatprep.subr.mxu0 0.0
    %515 = vmatpush1.xpose.msra.mxu0 0.0
    %516 = vmatprep.subr.mxu0 0.0
    %517 = vmatpush1.xpose.msra.mxu0 0.0
    %518 = vmatprep.subr.mxu0 0.0
    %519 = vmatpush1.xpose.msra.mxu0 0.0
    %520 = vmatprep.subr.mxu0 0.0
    %521 = vmatpush1.xpose.msra.mxu0 0.0
    %522 = vmatprep.subr.mxu0 0.0
    %523 = vmatpush1.xpose.msra.mxu0 0.0
    %524 = vmatprep.subr.mxu0 0.0
    %525 = vmatpush1.xpose.msra.mxu0 0.0
    %526 = vmatprep.subr.mxu0 0.0
    %527 = vmatpush1.xpose.msra.mxu0 0.0
    %528 = vmatprep.subr.mxu0 0.0
    %529 = vmatpush1.xpose.msra.mxu0 0.0
    %530 = vmatprep.subr.mxu0 0.0
    %531 = vmatpush1.xpose.msra.mxu0 0.0
    %532 = vmatprep.subr.mxu0 0.0
    %533 = vmatpush1.xpose.msra.mxu0 0.0
    %534 = vmatprep.subr.mxu0 0.0
    %535 = vmatpush1.xpose.msra.mxu0 0.0
    %536 = vmatprep.subr.mxu0 0.0
    %537 = vmatpush1.xpose.msra.mxu0 0.0
    %538 = vmatprep.subr.mxu0 0.0
    %539 = vmatpush1.xpose.msra.mxu0 0.0
    %540 = vmatprep.subr.mxu0 0.0
    %541 = vmatpush1.xpose.msra.mxu0 0.0
    %542 = vmatprep.subr.mxu0 0.0
    %543 = vmatpush1.xpose.msra.mxu0 0.0
    %544 = vmatprep.subr.mxu0 0.0
    %545 = vmatpush1.xpose.msra.mxu0 0.0
    %546 = vmatprep.subr.mxu0 0.0
    %547 = vmatpush1.xpose.msra.mxu0 0.0
    %548 = vmatprep.mubr.f32.mxu0 0.0
    %549 = vmatmul.mubr.f32.gmra.mrb[0].mxu0 %v480
    %v550 = vpop.f32.mrb[0].mxu0
    %v551 = vadd.f32 0.0, %v550
    %v552 = vpop.f32.mrb[0].mxu0
    %553 = vdwg.mxu0
    %554 = vrot.lane.b32.xlu0 %v168, 96
    %v555 = vpop.permute.xlu0 %554
    %v556 = vsel %vm175, %v168, 0
    %v558 = vsel %vm175, %v555, 0
    %560 = vmatprep.subr.mxu0 0.0
    %561 = vmatpush1.xpose.msra.mxu0 %v558
    %562 = vmatprep.subr.mxu0 0.0
    %563 = vmatpush1.xpose.msra.mxu0 0.0
    %564 = vmatprep.subr.mxu0 0.0
    %565 = vmatpush1.xpose.msra.mxu0 0.0
    %566 = vmatprep.subr.mxu0 0.0
    %567 = vmatpush1.xpose.msra.mxu0 0.0
    %568 = vmatprep.subr.mxu0 0.0
    %569 = vmatpush1.xpose.msra.mxu0 0.0
    %570 = vmatprep.subr.mxu0 0.0
    %571 = vmatpush1.xpose.msra.mxu0 0.0
    %572 = vmatprep.subr.mxu0 0.0
    %573 = vmatpush1.xpose.msra.mxu0 0.0
    %574 = vmatprep.subr.mxu0 0.0
    %575 = vmatpush1.xpose.msra.mxu0 0.0
    %576 = vmatprep.subr.mxu0 0.0
    %577 = vmatpush1.xpose.msra.mxu0 0.0
    %578 = vmatprep.subr.mxu0 0.0
    %579 = vmatpush1.xpose.msra.mxu0 0.0
    %580 = vmatprep.subr.mxu0 0.0
    %581 = vmatpush1.xpose.msra.mxu0 0.0
    %582 = vmatprep.subr.mxu0 0.0
    %583 = vmatpush1.xpose.msra.mxu0 0.0
    %584 = vmatprep.subr.mxu0 0.0
    %585 = vmatpush1.xpose.msra.mxu0 0.0
    %586 = vmatprep.subr.mxu0 0.0
    %587 = vmatpush1.xpose.msra.mxu0 0.0
    %588 = vmatprep.subr.mxu0 0.0
    %589 = vmatpush1.xpose.msra.mxu0 0.0
    %590 = vmatprep.subr.mxu0 0.0
    %591 = vmatpush1.xpose.msra.mxu0 0.0
    %592 = vmatprep.subr.mxu0 0.0
    %593 = vmatpush1.xpose.msra.mxu0 0.0
    %594 = vmatprep.subr.mxu0 0.0
    %595 = vmatpush1.xpose.msra.mxu0 0.0
    %596 = vmatprep.subr.mxu0 0.0
    %597 = vmatpush1.xpose.msra.mxu0 0.0
    %598 = vmatprep.subr.mxu0 0.0
    %599 = vmatpush1.xpose.msra.mxu0 0.0
    %600 = vmatprep.subr.mxu0 0.0
    %601 = vmatpush1.xpose.msra.mxu0 0.0
    %602 = vmatprep.subr.mxu0 0.0
    %603 = vmatpush1.xpose.msra.mxu0 0.0
    %604 = vmatprep.subr.mxu0 0.0
    %605 = vmatpush1.xpose.msra.mxu0 0.0
    %606 = vmatprep.subr.mxu0 0.0
    %607 = vmatpush1.xpose.msra.mxu0 0.0
    %608 = vmatprep.subr.mxu0 0.0
    %609 = vmatpush1.xpose.msra.mxu0 0.0
    %610 = vmatprep.subr.mxu0 0.0
    %611 = vmatpush1.xpose.msra.mxu0 0.0
    %612 = vmatprep.subr.mxu0 0.0
    %613 = vmatpush1.xpose.msra.mxu0 0.0
    %614 = vmatprep.subr.mxu0 0.0
    %615 = vmatpush1.xpose.msra.mxu0 0.0
    %616 = vmatprep.subr.mxu0 0.0
    %617 = vmatpush1.xpose.msra.mxu0 0.0
    %618 = vmatprep.subr.mxu0 0.0
    %619 = vmatpush1.xpose.msra.mxu0 0.0
    %620 = vmatprep.subr.mxu0 0.0
    %621 = vmatpush1.xpose.msra.mxu0 0.0
    %622 = vmatprep.subr.mxu0 0.0
    %623 = vmatpush1.xpose.msra.mxu0 0.0
    %624 = vmatprep.mubr.f32.mxu0 0.0
    %625 = vmatmul.mubr.f32.gmra.mrb[0].mxu0 %v556
    %v626 = vpop.f32.mrb[0].mxu0
    %v627 = vadd.f32 0.0, %v626
    %v628 = vpop.f32.mrb[0].mxu0
    %629 = vdwg.mxu0
    %630 = vrot.lane.b32.xlu0 %v170, 96
    %v631 = vpop.permute.xlu0 %630
    %v632 = vsel %vm175, %v170, 0
    %v634 = vsel %vm175, %v631, 0
    %636 = vmatprep.subr.mxu0 0.0
    %637 = vmatpush1.xpose.msra.mxu0 %v634
    %638 = vmatprep.subr.mxu0 0.0
    %639 = vmatpush1.xpose.msra.mxu0 0.0
    %640 = vmatprep.subr.mxu0 0.0
    %641 = vmatpush1.xpose.msra.mxu0 0.0
    %642 = vmatprep.subr.mxu0 0.0
    %643 = vmatpush1.xpose.msra.mxu0 0.0
    %644 = vmatprep.subr.mxu0 0.0
    %645 = vmatpush1.xpose.msra.mxu0 0.0
    %646 = vmatprep.subr.mxu0 0.0
    %647 = vmatpush1.xpose.msra.mxu0 0.0
    %648 = vmatprep.subr.mxu0 0.0
    %649 = vmatpush1.xpose.msra.mxu0 0.0
    %650 = vmatprep.subr.mxu0 0.0
    %651 = vmatpush1.xpose.msra.mxu0 0.0
    %652 = vmatprep.subr.mxu0 0.0
    %653 = vmatpush1.xpose.msra.mxu0 0.0
    %654 = vmatprep.subr.mxu0 0.0
    %655 = vmatpush1.xpose.msra.mxu0 0.0
    %656 = vmatprep.subr.mxu0 0.0
    %657 = vmatpush1.xpose.msra.mxu0 0.0
    %658 = vmatprep.subr.mxu0 0.0
    %659 = vmatpush1.xpose.msra.mxu0 0.0
    %660 = vmatprep.subr.mxu0 0.0
    %661 = vmatpush1.xpose.msra.mxu0 0.0
    %662 = vmatprep.subr.mxu0 0.0
    %663 = vmatpush1.xpose.msra.mxu0 0.0
    %664 = vmatprep.subr.mxu0 0.0
    %665 = vmatpush1.xpose.msra.mxu0 0.0
    %666 = vmatprep.subr.mxu0 0.0
    %667 = vmatpush1.xpose.msra.mxu0 0.0
    %668 = vmatprep.subr.mxu0 0.0
    %669 = vmatpush1.xpose.msra.mxu0 0.0
    %670 = vmatprep.subr.mxu0 0.0
    %671 = vmatpush1.xpose.msra.mxu0 0.0
    %672 = vmatprep.subr.mxu0 0.0
    %673 = vmatpush1.xpose.msra.mxu0 0.0
    %674 = vmatprep.subr.mxu0 0.0
    %675 = vmatpush1.xpose.msra.mxu0 0.0
    %676 = vmatprep.subr.mxu0 0.0
    %677 = vmatpush1.xpose.msra.mxu0 0.0
    %678 = vmatprep.subr.mxu0 0.0
    %679 = vmatpush1.xpose.msra.mxu0 0.0
    %680 = vmatprep.subr.mxu0 0.0
    %681 = vmatpush1.xpose.msra.mxu0 0.0
    %682 = vmatprep.subr.mxu0 0.0
    %683 = vmatpush1.xpose.msra.mxu0 0.0
    %684 = vmatprep.subr.mxu0 0.0
    %685 = vmatpush1.xpose.msra.mxu0 0.0
    %686 = vmatprep.subr.mxu0 0.0
    %687 = vmatpush1.xpose.msra.mxu0 0.0
    %688 = vmatprep.subr.mxu0 0.0
    %689 = vmatpush1.xpose.msra.mxu0 0.0
    %690 = vmatprep.subr.mxu0 0.0
    %691 = vmatpush1.xpose.msra.mxu0 0.0
    %692 = vmatprep.subr.mxu0 0.0
    %693 = vmatpush1.xpose.msra.mxu0 0.0
    %694 = vmatprep.subr.mxu0 0.0
    %695 = vmatpush1.xpose.msra.mxu0 0.0
    %696 = vmatprep.subr.mxu0 0.0
    %697 = vmatpush1.xpose.msra.mxu0 0.0
    %698 = vmatprep.subr.mxu0 0.0
    %699 = vmatpush1.xpose.msra.mxu0 0.0
    %700 = vmatprep.mubr.f32.mxu0 0.0
    %701 = vmatmul.mubr.f32.gmra.mrb[0].mxu0 %v632
    %v702 = vpop.f32.mrb[0].mxu0
    %v703 = vadd.f32 0.0, %v702
    %v704 = vpop.f32.mrb[0].mxu0
    %705 = vdwg.mxu0
    %706 = vrot.lane.b32.xlu0 %v172, 96
    %v707 = vpop.permute.xlu0 %706
    %v708 = vsel %vm175, %v172, 0
    %v710 = vsel %vm175, %v707, 0
    %712 = vmatprep.subr.mxu0 0.0
    %713 = vmatpush1.xpose.msra.mxu0 %v710
    %714 = vmatprep.subr.mxu0 0.0
    %715 = vmatpush1.xpose.msra.mxu0 0.0
    %716 = vmatprep.subr.mxu0 0.0
    %717 = vmatpush1.xpose.msra.mxu0 0.0
    %718 = vmatprep.subr.mxu0 0.0
    %719 = vmatpush1.xpose.msra.mxu0 0.0
    %720 = vmatprep.subr.mxu0 0.0
    %721 = vmatpush1.xpose.msra.mxu0 0.0
    %722 = vmatprep.subr.mxu0 0.0
    %723 = vmatpush1.xpose.msra.mxu0 0.0
    %724 = vmatprep.subr.mxu0 0.0
    %725 = vmatpush1.xpose.msra.mxu0 0.0
    %726 = vmatprep.subr.mxu0 0.0
    %727 = vmatpush1.xpose.msra.mxu0 0.0
    %728 = vmatprep.subr.mxu0 0.0
    %729 = vmatpush1.xpose.msra.mxu0 0.0
    %730 = vmatprep.subr.mxu0 0.0
    %731 = vmatpush1.xpose.msra.mxu0 0.0
    %732 = vmatprep.subr.mxu0 0.0
    %733 = vmatpush1.xpose.msra.mxu0 0.0
    %734 = vmatprep.subr.mxu0 0.0
    %735 = vmatpush1.xpose.msra.mxu0 0.0
    %736 = vmatprep.subr.mxu0 0.0
    %737 = vmatpush1.xpose.msra.mxu0 0.0
    %738 = vmatprep.subr.mxu0 0.0
    %739 = vmatpush1.xpose.msra.mxu0 0.0
    %740 = vmatprep.subr.mxu0 0.0
    %741 = vmatpush1.xpose.msra.mxu0 0.0
    %742 = vmatprep.subr.mxu0 0.0
    %743 = vmatpush1.xpose.msra.mxu0 0.0
    %744 = vmatprep.subr.mxu0 0.0
    %745 = vmatpush1.xpose.msra.mxu0 0.0
    %746 = vmatprep.subr.mxu0 0.0
    %747 = vmatpush1.xpose.msra.mxu0 0.0
    %748 = vmatprep.subr.mxu0 0.0
    %749 = vmatpush1.xpose.msra.mxu0 0.0
    %750 = vmatprep.subr.mxu0 0.0
    %751 = vmatpush1.xpose.msra.mxu0 0.0
    %752 = vmatprep.subr.mxu0 0.0
    %753 = vmatpush1.xpose.msra.mxu0 0.0
    %754 = vmatprep.subr.mxu0 0.0
    %755 = vmatpush1.xpose.msra.mxu0 0.0
    %756 = vmatprep.subr.mxu0 0.0
    %757 = vmatpush1.xpose.msra.mxu0 0.0
    %758 = vmatprep.subr.mxu0 0.0
    %759 = vmatpush1.xpose.msra.mxu0 0.0
    %760 = vmatprep.subr.mxu0 0.0
    %761 = vmatpush1.xpose.msra.mxu0 0.0
    %762 = vmatprep.subr.mxu0 0.0
    %763 = vmatpush1.xpose.msra.mxu0 0.0
    %764 = vmatprep.subr.mxu0 0.0
    %765 = vmatpush1.xpose.msra.mxu0 0.0
    %766 = vmatprep.subr.mxu0 0.0
    %767 = vmatpush1.xpose.msra.mxu0 0.0
    %768 = vmatprep.subr.mxu0 0.0
    %769 = vmatpush1.xpose.msra.mxu0 0.0
    %770 = vmatprep.subr.mxu0 0.0
    %771 = vmatpush1.xpose.msra.mxu0 0.0
    %772 = vmatprep.subr.mxu0 0.0
    %773 = vmatpush1.xpose.msra.mxu0 0.0
    %774 = vmatprep.subr.mxu0 0.0
    %775 = vmatpush1.xpose.msra.mxu0 0.0
    %776 = vmatprep.mubr.f32.mxu0 0.0
    %777 = vmatmul.mubr.f32.gmra.mrb[0].mxu0 %v708
    %v778 = vpop.f32.mrb[0].mxu0
    %v779 = vadd.f32 0.0, %v778
    %v780 = vpop.f32.mrb[0].mxu0
    %781 = vdwg.mxu0
    %v782 = vadd.f32 %v247, %v66
    %v783 = vadd.f32 %v323, %v67
    %v784 = vadd.f32 %v399, %v66
    %v785 = vadd.f32 %v475, %v67
    %v786 = vadd.f32 %v551, %v66
    %v787 = vadd.f32 %v627, %v67
    %v788 = vadd.f32 %v703, %v66
    %v789 = vadd.f32 %v779, %v67
    %v790 = vsel %vm175, %v782, -inf
    %791 = vmax.xlane.f32.xlu0 %v790
    %v792 = vpop.xlane.xlu0 %791
    %v793 = vsel %vm175, %v783, -inf
    %794 = vmax.xlane.f32.xlu0 %v793
    %v795 = vpop.xlane.xlu0 %794
    %v796 = vsel %vm175, %v784, -inf
    %797 = vmax.xlane.f32.xlu0 %v796
    %v798 = vpop.xlane.xlu0 %797
    %v799 = vsel %vm175, %v785, -inf
    %800 = vmax.xlane.f32.xlu0 %v799
    %v801 = vpop.xlane.xlu0 %800
    %v802 = vsel %vm175, %v786, -inf
    %803 = vmax.xlane.f32.xlu0 %v802
    %v804 = vpop.xlane.xlu0 %803
    %v805 = vsel %vm175, %v787, -inf
    %806 = vmax.xlane.f32.xlu0 %v805
    %v807 = vpop.xlane.xlu0 %806
    %v808 = vsel %vm175, %v788, -inf
    %809 = vmax.xlane.f32.xlu0 %v808
    %v810 = vpop.xlane.xlu0 %809
    %v811 = vsel %vm175, %v789, -inf
    %812 = vmax.xlane.f32.xlu0 %v811
    %v813 = vpop.xlane.xlu0 %812
    %v814 = vsub.f32 %v782, %v792
    %v815 = vsub.f32 %v783, %v795
    %v816 = vsub.f32 %v784, %v798
    %v817 = vsub.f32 %v785, %v801
    %v818 = vsub.f32 %v786, %v804
    %v819 = vsub.f32 %v787, %v807
    %v820 = vsub.f32 %v788, %v810
    %v821 = vsub.f32 %v789, %v813
    %v822 = vmul.f32 %v814, 1.442695
    %v823 = vpow.pop %v822
    %v824 = vmul.f32 %v815, 1.442695
    %v825 = vpow.pop %v824
    %v826 = vmul.f32 %v816, 1.442695
    %v827 = vpow.pop %v826
    %v828 = vmul.f32 %v817, 1.442695
    %v829 = vpow.pop %v828
    %v830 = vmul.f32 %v818, 1.442695
    %v831 = vpow.pop %v830
    %v832 = vmul.f32 %v819, 1.442695
    %v833 = vpow.pop %v832
    %v834 = vmul.f32 %v820, 1.442695
    %v835 = vpow.pop %v834
    %v836 = vmul.f32 %v821, 1.442695
    %v837 = vpow.pop %v836
    %v838 = vsel %vm175, %v823, 0.0
    %839 = vadd.xlane.f32.xlu0 %v838
    %v840 = vpop.xlane.xlu0 %839
    %v841 = vsel %vm175, %v825, 0.0
    %842 = vadd.xlane.f32.xlu0 %v841
    %v843 = vpop.xlane.xlu0 %842
    %v844 = vsel %vm175, %v827, 0.0
    %845 = vadd.xlane.f32.xlu0 %v844
    %v846 = vpop.xlane.xlu0 %845
    %v847 = vsel %vm175, %v829, 0.0
    %848 = vadd.xlane.f32.xlu0 %v847
    %v849 = vpop.xlane.xlu0 %848
    %v850 = vsel %vm175, %v831, 0.0
    %851 = vadd.xlane.f32.xlu0 %v850
    %v852 = vpop.xlane.xlu0 %851
    %v853 = vsel %vm175, %v833, 0.0
    %854 = vadd.xlane.f32.xlu0 %v853
    %v855 = vpop.xlane.xlu0 %854
    %v856 = vsel %vm175, %v835, 0.0
    %857 = vadd.xlane.f32.xlu0 %v856
    %v858 = vpop.xlane.xlu0 %857
    %v859 = vsel %vm175, %v837, 0.0
    %860 = vadd.xlane.f32.xlu0 %v859
    %v861 = vpop.xlane.xlu0 %860
    %v862 = vrcp.pop %v840
    %v863 = vmul.f32 %v823, %v862
    %v864 = vrcp.pop %v843
    %v865 = vmul.f32 %v825, %v864
    %v866 = vrcp.pop %v846
    %v867 = vmul.f32 %v827, %v866
    %v868 = vrcp.pop %v849
    %v869 = vmul.f32 %v829, %v868
    %v870 = vrcp.pop %v852
    %v871 = vmul.f32 %v831, %v870
    %v872 = vrcp.pop %v855
    %v873 = vmul.f32 %v833, %v872
    %v874 = vrcp.pop %v858
    %v875 = vmul.f32 %v835, %v874
    %v876 = vrcp.pop %v861
    %v877 = vmul.f32 %v837, %v876
    %878 = vrot.lane.b32.xlu0 %v151, 64
    %v879 = vpop.permute.xlu0 %878
    %v882 = vsel %vm175, %v863, 0
    %884 = vmatprep.subr.mxu0 0.0
    %885 = vmatpush1.msra.mxu0 %v879
    %886 = vmatprep.subr.mxu0 0.0
    %887 = vmatpush1.msra.mxu0 0.0
    %888 = vmatprep.subr.mxu0 0.0
    %889 = vmatpush1.msra.mxu0 0.0
    %890 = vmatprep.subr.mxu0 0.0
    %891 = vmatpush1.msra.mxu0 0.0
    %892 = vmatprep.subr.mxu0 0.0
    %893 = vmatpush1.msra.mxu0 0.0
    %894 = vmatprep.subr.mxu0 0.0
    %895 = vmatpush1.msra.mxu0 0.0
    %896 = vmatprep.subr.mxu0 0.0
    %897 = vmatpush1.msra.mxu0 0.0
    %898 = vmatprep.subr.mxu0 0.0
    %899 = vmatpush1.msra.mxu0 0.0
    %900 = vmatprep.subr.mxu0 0.0
    %901 = vmatpush1.msra.mxu0 0.0
    %902 = vmatprep.subr.mxu0 0.0
    %903 = vmatpush1.msra.mxu0 0.0
    %904 = vmatprep.subr.mxu0 0.0
    %905 = vmatpush1.msra.mxu0 0.0
    %906 = vmatprep.subr.mxu0 0.0
    %907 = vmatpush1.msra.mxu0 0.0
    %908 = vmatprep.subr.mxu0 0.0
    %909 = vmatpush1.msra.mxu0 0.0
    %910 = vmatprep.subr.mxu0 0.0
    %911 = vmatpush1.msra.mxu0 0.0
    %912 = vmatprep.subr.mxu0 0.0
    %913 = vmatpush1.msra.mxu0 0.0
    %914 = vmatprep.subr.mxu0 0.0
    %915 = vmatpush1.msra.mxu0 0.0
    %916 = vmatprep.subr.mxu0 0.0
    %917 = vmatpush1.msra.mxu0 0.0
    %918 = vmatprep.subr.mxu0 0.0
    %919 = vmatpush1.msra.mxu0 0.0
    %920 = vmatprep.subr.mxu0 0.0
    %921 = vmatpush1.msra.mxu0 0.0
    %922 = vmatprep.subr.mxu0 0.0
    %923 = vmatpush1.msra.mxu0 0.0
    %924 = vmatprep.subr.mxu0 0.0
    %925 = vmatpush1.msra.mxu0 0.0
    %926 = vmatprep.subr.mxu0 0.0
    %927 = vmatpush1.msra.mxu0 0.0
    %928 = vmatprep.subr.mxu0 0.0
    %929 = vmatpush1.msra.mxu0 0.0
    %930 = vmatprep.subr.mxu0 0.0
    %931 = vmatpush1.msra.mxu0 0.0
    %932 = vmatprep.subr.mxu0 0.0
    %933 = vmatpush1.msra.mxu0 0.0
    %934 = vmatprep.subr.mxu0 0.0
    %935 = vmatpush1.msra.mxu0 0.0
    %936 = vmatprep.subr.mxu0 0.0
    %937 = vmatpush1.msra.mxu0 0.0
    %938 = vmatprep.subr.mxu0 0.0
    %939 = vmatpush1.msra.mxu0 0.0
    %940 = vmatprep.subr.mxu0 0.0
    %941 = vmatpush1.msra.mxu0 0.0
    %942 = vmatprep.subr.mxu0 0.0
    %943 = vmatpush1.msra.mxu0 0.0
    %944 = vmatprep.subr.mxu0 0.0
    %945 = vmatpush1.msra.mxu0 0.0
    %946 = vmatprep.subr.mxu0 0.0
    %947 = vmatpush1.msra.mxu0 0.0
    %948 = vmatprep.mubr.f32.mxu0 0.0
    %949 = vmatmul.mubr.f32.gmra.mrb[0].mxu0 %v882
    %v950 = vpop.f32.mrb[0].mxu0
    %v951 = vadd.f32 0.0, %v950
    %v952 = vpop.f32.mrb[0].mxu0
    %953 = vdwg.mxu0
    %954 = vrot.lane.b32.xlu0 %v156, 64
    %v955 = vpop.permute.xlu0 %954
    %v958 = vsel %vm175, %v865, 0
    %960 = vmatprep.subr.mxu0 0.0
    %961 = vmatpush1.msra.mxu0 %v955
    %962 = vmatprep.subr.mxu0 0.0
    %963 = vmatpush1.msra.mxu0 0.0
    %964 = vmatprep.subr.mxu0 0.0
    %965 = vmatpush1.msra.mxu0 0.0
    %966 = vmatprep.subr.mxu0 0.0
    %967 = vmatpush1.msra.mxu0 0.0
    %968 = vmatprep.subr.mxu0 0.0
    %969 = vmatpush1.msra.mxu0 0.0
    %970 = vmatprep.subr.mxu0 0.0
    %971 = vmatpush1.msra.mxu0 0.0
    %972 = vmatprep.subr.mxu0 0.0
    %973 = vmatpush1.msra.mxu0 0.0
    %974 = vmatprep.subr.mxu0 0.0
    %975 = vmatpush1.msra.mxu0 0.0
    %976 = vmatprep.subr.mxu0 0.0
    %977 = vmatpush1.msra.mxu0 0.0
    %978 = vmatprep.subr.mxu0 0.0
    %979 = vmatpush1.msra.mxu0 0.0
    %980 = vmatprep.subr.mxu0 0.0
    %981 = vmatpush1.msra.mxu0 0.0
    %982 = vmatprep.subr.mxu0 0.0
    %983 = vmatpush1.msra.mxu0 0.0
    %984 = vmatprep.subr.mxu0 0.0
    %985 = vmatpush1.msra.mxu0 0.0
    %986 = vmatprep.subr.mxu0 0.0
    %987 = vmatpush1.msra.mxu0 0.0
    %988 = vmatprep.subr.mxu0 0.0
    %989 = vmatpush1.msra.mxu0 0.0
    %990 = vmatprep.subr.mxu0 0.0
    %991 = vmatpush1.msra.mxu0 0.0
    %992 = vmatprep.subr.mxu0 0.0
    %993 = vmatpush1.msra.mxu0 0.0
    %994 = vmatprep.subr.mxu0 0.0
    %995 = vmatpush1.msra.mxu0 0.0
    %996 = vmatprep.subr.mxu0 0.0
    %997 = vmatpush1.msra.mxu0 0.0
    %998 = vmatprep.subr.mxu0 0.0
    %999 = vmatpush1.msra.mxu0 0.0
    %1000 = vmatprep.subr.mxu0 0.0
    %1001 = vmatpush1.msra.mxu0 0.0
    %1002 = vmatprep.subr.mxu0 0.0
    %1003 = vmatpush1.msra.mxu0 0.0
    %1004 = vmatprep.subr.mxu0 0.0
    %1005 = vmatpush1.msra.mxu0 0.0
    %1006 = vmatprep.subr.mxu0 0.0
    %1007 = vmatpush1.msra.mxu0 0.0
    %1008 = vmatprep.subr.mxu0 0.0
    %1009 = vmatpush1.msra.mxu0 0.0
    %1010 = vmatprep.subr.mxu0 0.0
    %1011 = vmatpush1.msra.mxu0 0.0
    %1012 = vmatprep.subr.mxu0 0.0
    %1013 = vmatpush1.msra.mxu0 0.0
    %1014 = vmatprep.subr.mxu0 0.0
    %1015 = vmatpush1.msra.mxu0 0.0
    %1016 = vmatprep.subr.mxu0 0.0
    %1017 = vmatpush1.msra.mxu0 0.0
    %1018 = vmatprep.subr.mxu0 0.0
    %1019 = vmatpush1.msra.mxu0 0.0
    %1020 = vmatprep.subr.mxu0 0.0
    %1021 = vmatpush1.msra.mxu0 0.0
    %1022 = vmatprep.subr.mxu0 0.0
    %1023 = vmatpush1.msra.mxu0 0.0
    %1024 = vmatprep.mubr.f32.mxu0 0.0
    %1025 = vmatmul.mubr.f32.gmra.mrb[0].mxu0 %v958
    %v1026 = vpop.f32.mrb[0].mxu0
    %v1027 = vadd.f32 0.0, %v1026
    %v1028 = vpop.f32.mrb[0].mxu0
    %1029 = vdwg.mxu0
    %1030 = vrot.lane.b32.xlu0 %v162, 64
    %v1031 = vpop.permute.xlu0 %1030
    %v1034 = vsel %vm175, %v867, 0
    %1036 = vmatprep.subr.mxu0 0.0
    %1037 = vmatpush1.msra.mxu0 %v1031
    %1038 = vmatprep.subr.mxu0 0.0
    %1039 = vmatpush1.msra.mxu0 0.0
    %1040 = vmatprep.subr.mxu0 0.0
    %1041 = vmatpush1.msra.mxu0 0.0
    %1042 = vmatprep.subr.mxu0 0.0
    %1043 = vmatpush1.msra.mxu0 0.0
    %1044 = vmatprep.subr.mxu0 0.0
    %1045 = vmatpush1.msra.mxu0 0.0
    %1046 = vmatprep.subr.mxu0 0.0
    %1047 = vmatpush1.msra.mxu0 0.0
    %1048 = vmatprep.subr.mxu0 0.0
    %1049 = vmatpush1.msra.mxu0 0.0
    %1050 = vmatprep.subr.mxu0 0.0
    %1051 = vmatpush1.msra.mxu0 0.0
    %1052 = vmatprep.subr.mxu0 0.0
    %1053 = vmatpush1.msra.mxu0 0.0
    %1054 = vmatprep.subr.mxu0 0.0
    %1055 = vmatpush1.msra.mxu0 0.0
    %1056 = vmatprep.subr.mxu0 0.0
    %1057 = vmatpush1.msra.mxu0 0.0
    %1058 = vmatprep.subr.mxu0 0.0
    %1059 = vmatpush1.msra.mxu0 0.0
    %1060 = vmatprep.subr.mxu0 0.0
    %1061 = vmatpush1.msra.mxu0 0.0
    %1062 = vmatprep.subr.mxu0 0.0
    %1063 = vmatpush1.msra.mxu0 0.0
    %1064 = vmatprep.subr.mxu0 0.0
    %1065 = vmatpush1.msra.mxu0 0.0
    %1066 = vmatprep.subr.mxu0 0.0
    %1067 = vmatpush1.msra.mxu0 0.0
    %1068 = vmatprep.subr.mxu0 0.0
    %1069 = vmatpush1.msra.mxu0 0.0
    %1070 = vmatprep.subr.mxu0 0.0
    %1071 = vmatpush1.msra.mxu0 0.0
    %1072 = vmatprep.subr.mxu0 0.0
    %1073 = vmatpush1.msra.mxu0 0.0
    %1074 = vmatprep.subr.mxu0 0.0
    %1075 = vmatpush1.msra.mxu0 0.0
    %1076 = vmatprep.subr.mxu0 0.0
    %1077 = vmatpush1.msra.mxu0 0.0
    %1078 = vmatprep.subr.mxu0 0.0
    %1079 = vmatpush1.msra.mxu0 0.0
    %1080 = vmatprep.subr.mxu0 0.0
    %1081 = vmatpush1.msra.mxu0 0.0
    %1082 = vmatprep.subr.mxu0 0.0
    %1083 = vmatpush1.msra.mxu0 0.0
    %1084 = vmatprep.subr.mxu0 0.0
    %1085 = vmatpush1.msra.mxu0 0.0
    %1086 = vmatprep.subr.mxu0 0.0
    %1087 = vmatpush1.msra.mxu0 0.0
    %1088 = vmatprep.subr.mxu0 0.0
    %1089 = vmatpush1.msra.mxu0 0.0
    %1090 = vmatprep.subr.mxu0 0.0
    %1091 = vmatpush1.msra.mxu0 0.0
    %1092 = vmatprep.subr.mxu0 0.0
    %1093 = vmatpush1.msra.mxu0 0.0
    %1094 = vmatprep.subr.mxu0 0.0
    %1095 = vmatpush1.msra.mxu0 0.0
    %1096 = vmatprep.subr.mxu0 0.0
    %1097 = vmatpush1.msra.mxu0 0.0
    %1098 = vmatprep.subr.mxu0 0.0
    %1099 = vmatpush1.msra.mxu0 0.0
    %1100 = vmatprep.mubr.f32.mxu0 0.0
    %1101 = vmatmul.mubr.f32.gmra.mrb[0].mxu0 %v1034
    %v1102 = vpop.f32.mrb[0].mxu0
    %v1103 = vadd.f32 0.0, %v1102
    %v1104 = vpop.f32.mrb[0].mxu0
    %1105 = vdwg.mxu0
    %1106 = vrot.lane.b32.xlu0 %v164, 64
    %v1107 = vpop.permute.xlu0 %1106
    %v1110 = vsel %vm175, %v869, 0
    %1112 = vmatprep.subr.mxu0 0.0
    %1113 = vmatpush1.msra.mxu0 %v1107
    %1114 = vmatprep.subr.mxu0 0.0
    %1115 = vmatpush1.msra.mxu0 0.0
    %1116 = vmatprep.subr.mxu0 0.0
    %1117 = vmatpush1.msra.mxu0 0.0
    %1118 = vmatprep.subr.mxu0 0.0
    %1119 = vmatpush1.msra.mxu0 0.0
    %1120 = vmatprep.subr.mxu0 0.0
    %1121 = vmatpush1.msra.mxu0 0.0
    %1122 = vmatprep.subr.mxu0 0.0
    %1123 = vmatpush1.msra.mxu0 0.0
    %1124 = vmatprep.subr.mxu0 0.0
    %1125 = vmatpush1.msra.mxu0 0.0
    %1126 = vmatprep.subr.mxu0 0.0
    %1127 = vmatpush1.msra.mxu0 0.0
    %1128 = vmatprep.subr.mxu0 0.0
    %1129 = vmatpush1.msra.mxu0 0.0
    %1130 = vmatprep.subr.mxu0 0.0
    %1131 = vmatpush1.msra.mxu0 0.0
    %1132 = vmatprep.subr.mxu0 0.0
    %1133 = vmatpush1.msra.mxu0 0.0
    %1134 = vmatprep.subr.mxu0 0.0
    %1135 = vmatpush1.msra.mxu0 0.0
    %1136 = vmatprep.subr.mxu0 0.0
    %1137 = vmatpush1.msra.mxu0 0.0
    %1138 = vmatprep.subr.mxu0 0.0
    %1139 = vmatpush1.msra.mxu0 0.0
    %1140 = vmatprep.subr.mxu0 0.0
    %1141 = vmatpush1.msra.mxu0 0.0
    %1142 = vmatprep.subr.mxu0 0.0
    %1143 = vmatpush1.msra.mxu0 0.0
    %1144 = vmatprep.subr.mxu0 0.0
    %1145 = vmatpush1.msra.mxu0 0.0
    %1146 = vmatprep.subr.mxu0 0.0
    %1147 = vmatpush1.msra.mxu0 0.0
    %1148 = vmatprep.subr.mxu0 0.0
    %1149 = vmatpush1.msra.mxu0 0.0
    %1150 = vmatprep.subr.mxu0 0.0
    %1151 = vmatpush1.msra.mxu0 0.0
    %1152 = vmatprep.subr.mxu0 0.0
    %1153 = vmatpush1.msra.mxu0 0.0
    %1154 = vmatprep.subr.mxu0 0.0
    %1155 = vmatpush1.msra.mxu0 0.0
    %1156 = vmatprep.subr.mxu0 0.0
    %1157 = vmatpush1.msra.mxu0 0.0
    %1158 = vmatprep.subr.mxu0 0.0
    %1159 = vmatpush1.msra.mxu0 0.0
    %1160 = vmatprep.subr.mxu0 0.0
    %1161 = vmatpush1.msra.mxu0 0.0
    %1162 = vmatprep.subr.mxu0 0.0
    %1163 = vmatpush1.msra.mxu0 0.0
    %1164 = vmatprep.subr.mxu0 0.0
    %1165 = vmatpush1.msra.mxu0 0.0
    %1166 = vmatprep.subr.mxu0 0.0
    %1167 = vmatpush1.msra.mxu0 0.0
    %1168 = vmatprep.subr.mxu0 0.0
    %1169 = vmatpush1.msra.mxu0 0.0
    %1170 = vmatprep.subr.mxu0 0.0
    %1171 = vmatpush1.msra.mxu0 0.0
    %1172 = vmatprep.subr.mxu0 0.0
    %1173 = vmatpush1.msra.mxu0 0.0
    %1174 = vmatprep.subr.mxu0 0.0
    %1175 = vmatpush1.msra.mxu0 0.0
    %1176 = vmatprep.mubr.f32.mxu0 0.0
    %1177 = vmatmul.mubr.f32.gmra.mrb[0].mxu0 %v1110
    %v1178 = vpop.f32.mrb[0].mxu0
    %v1179 = vadd.f32 0.0, %v1178
    %v1180 = vpop.f32.mrb[0].mxu0
    %1181 = vdwg.mxu0
    %1182 = vrot.lane.b32.xlu0 %v166, 64
    %v1183 = vpop.permute.xlu0 %1182
    %v1186 = vsel %vm175, %v871, 0
    %1188 = vmatprep.subr.mxu0 0.0
    %1189 = vmatpush1.msra.mxu0 %v1183
    %1190 = vmatprep.subr.mxu0 0.0
    %1191 = vmatpush1.msra.mxu0 0.0
    %1192 = vmatprep.subr.mxu0 0.0
    %1193 = vmatpush1.msra.mxu0 0.0
    %1194 = vmatprep.subr.mxu0 0.0
    %1195 = vmatpush1.msra.mxu0 0.0
    %1196 = vmatprep.subr.mxu0 0.0
    %1197 = vmatpush1.msra.mxu0 0.0
    %1198 = vmatprep.subr.mxu0 0.0
    %1199 = vmatpush1.msra.mxu0 0.0
    %1200 = vmatprep.subr.mxu0 0.0
    %1201 = vmatpush1.msra.mxu0 0.0
    %1202 = vmatprep.subr.mxu0 0.0
    %1203 = vmatpush1.msra.mxu0 0.0
    %1204 = vmatprep.subr.mxu0 0.0
    %1205 = vmatpush1.msra.mxu0 0.0
    %1206 = vmatprep.subr.mxu0 0.0
    %1207 = vmatpush1.msra.mxu0 0.0
    %1208 = vmatprep.subr.mxu0 0.0
    %1209 = vmatpush1.msra.mxu0 0.0
    %1210 = vmatprep.subr.mxu0 0.0
    %1211 = vmatpush1.msra.mxu0 0.0
    %1212 = vmatprep.subr.mxu0 0.0
    %1213 = vmatpush1.msra.mxu0 0.0
    %1214 = vmatprep.subr.mxu0 0.0
    %1215 = vmatpush1.msra.mxu0 0.0
    %1216 = vmatprep.subr.mxu0 0.0
    %1217 = vmatpush1.msra.mxu0 0.0
    %1218 = vmatprep.subr.mxu0 0.0
    %1219 = vmatpush1.msra.mxu0 0.0
    %1220 = vmatprep.subr.mxu0 0.0
    %1221 = vmatpush1.msra.mxu0 0.0
    %1222 = vmatprep.subr.mxu0 0.0
    %1223 = vmatpush1.msra.mxu0 0.0
    %1224 = vmatprep.subr.mxu0 0.0
    %1225 = vmatpush1.msra.mxu0 0.0
    %1226 = vmatprep.subr.mxu0 0.0
    %1227 = vmatpush1.msra.mxu0 0.0
    %1228 = vmatprep.subr.mxu0 0.0
    %1229 = vmatpush1.msra.mxu0 0.0
    %1230 = vmatprep.subr.mxu0 0.0
    %1231 = vmatpush1.msra.mxu0 0.0
    %1232 = vmatprep.subr.mxu0 0.0
    %1233 = vmatpush1.msra.mxu0 0.0
    %1234 = vmatprep.subr.mxu0 0.0
    %1235 = vmatpush1.msra.mxu0 0.0
    %1236 = vmatprep.subr.mxu0 0.0
    %1237 = vmatpush1.msra.mxu0 0.0
    %1238 = vmatprep.subr.mxu0 0.0
    %1239 = vmatpush1.msra.mxu0 0.0
    %1240 = vmatprep.subr.mxu0 0.0
    %1241 = vmatpush1.msra.mxu0 0.0
    %1242 = vmatprep.subr.mxu0 0.0
    %1243 = vmatpush1.msra.mxu0 0.0
    %1244 = vmatprep.subr.mxu0 0.0
    %1245 = vmatpush1.msra.mxu0 0.0
    %1246 = vmatprep.subr.mxu0 0.0
    %1247 = vmatpush1.msra.mxu0 0.0
    %1248 = vmatprep.subr.mxu0 0.0
    %1249 = vmatpush1.msra.mxu0 0.0
    %1250 = vmatprep.subr.mxu0 0.0
    %1251 = vmatpush1.msra.mxu0 0.0
    %1252 = vmatprep.mubr.f32.mxu0 0.0
    %1253 = vmatmul.mubr.f32.gmra.mrb[0].mxu0 %v1186
    %v1254 = vpop.f32.mrb[0].mxu0
    %v1255 = vadd.f32 0.0, %v1254
    %v1256 = vpop.f32.mrb[0].mxu0
    %1257 = vdwg.mxu0
    %1258 = vrot.lane.b32.xlu0 %v168, 64
    %v1259 = vpop.permute.xlu0 %1258
    %v1262 = vsel %vm175, %v873, 0
    %1264 = vmatprep.subr.mxu0 0.0
    %1265 = vmatpush1.msra.mxu0 %v1259
    %1266 = vmatprep.subr.mxu0 0.0
    %1267 = vmatpush1.msra.mxu0 0.0
    %1268 = vmatprep.subr.mxu0 0.0
    %1269 = vmatpush1.msra.mxu0 0.0
    %1270 = vmatprep.subr.mxu0 0.0
    %1271 = vmatpush1.msra.mxu0 0.0
    %1272 = vmatprep.subr.mxu0 0.0
    %1273 = vmatpush1.msra.mxu0 0.0
    %1274 = vmatprep.subr.mxu0 0.0
    %1275 = vmatpush1.msra.mxu0 0.0
    %1276 = vmatprep.subr.mxu0 0.0
    %1277 = vmatpush1.msra.mxu0 0.0
    %1278 = vmatprep.subr.mxu0 0.0
    %1279 = vmatpush1.msra.mxu0 0.0
    %1280 = vmatprep.subr.mxu0 0.0
    %1281 = vmatpush1.msra.mxu0 0.0
    %1282 = vmatprep.subr.mxu0 0.0
    %1283 = vmatpush1.msra.mxu0 0.0
    %1284 = vmatprep.subr.mxu0 0.0
    %1285 = vmatpush1.msra.mxu0 0.0
    %1286 = vmatprep.subr.mxu0 0.0
    %1287 = vmatpush1.msra.mxu0 0.0
    %1288 = vmatprep.subr.mxu0 0.0
    %1289 = vmatpush1.msra.mxu0 0.0
    %1290 = vmatprep.subr.mxu0 0.0
    %1291 = vmatpush1.msra.mxu0 0.0
    %1292 = vmatprep.subr.mxu0 0.0
    %1293 = vmatpush1.msra.mxu0 0.0
    %1294 = vmatprep.subr.mxu0 0.0
    %1295 = vmatpush1.msra.mxu0 0.0
    %1296 = vmatprep.subr.mxu0 0.0
    %1297 = vmatpush1.msra.mxu0 0.0
    %1298 = vmatprep.subr.mxu0 0.0
    %1299 = vmatpush1.msra.mxu0 0.0
    %1300 = vmatprep.subr.mxu0 0.0
    %1301 = vmatpush1.msra.mxu0 0.0
    %1302 = vmatprep.subr.mxu0 0.0
    %1303 = vmatpush1.msra.mxu0 0.0
    %1304 = vmatprep.subr.mxu0 0.0
    %1305 = vmatpush1.msra.mxu0 0.0
    %1306 = vmatprep.subr.mxu0 0.0
    %1307 = vmatpush1.msra.mxu0 0.0
    %1308 = vmatprep.subr.mxu0 0.0
    %1309 = vmatpush1.msra.mxu0 0.0
    %1310 = vmatprep.subr.mxu0 0.0
    %1311 = vmatpush1.msra.mxu0 0.0
    %1312 = vmatprep.subr.mxu0 0.0
    %1313 = vmatpush1.msra.mxu0 0.0
    %1314 = vmatprep.subr.mxu0 0.0
    %1315 = vmatpush1.msra.mxu0 0.0
    %1316 = vmatprep.subr.mxu0 0.0
    %1317 = vmatpush1.msra.mxu0 0.0
    %1318 = vmatprep.subr.mxu0 0.0
    %1319 = vmatpush1.msra.mxu0 0.0
    %1320 = vmatprep.subr.mxu0 0.0
    %1321 = vmatpush1.msra.mxu0 0.0
    %1322 = vmatprep.subr.mxu0 0.0
    %1323 = vmatpush1.msra.mxu0 0.0
    %1324 = vmatprep.subr.mxu0 0.0
    %1325 = vmatpush1.msra.mxu0 0.0
    %1326 = vmatprep.subr.mxu0 0.0
    %1327 = vmatpush1.msra.mxu0 0.0
    %1328 = vmatprep.mubr.f32.mxu0 0.0
    %1329 = vmatmul.mubr.f32.gmra.mrb[0].mxu0 %v1262
    %v1330 = vpop.f32.mrb[0].mxu0
    %v1331 = vadd.f32 0.0, %v1330
    %v1332 = vpop.f32.mrb[0].mxu0
    %1333 = vdwg.mxu0
    %1334 = vrot.lane.b32.xlu0 %v170, 64
    %v1335 = vpop.permute.xlu0 %1334
    %v1338 = vsel %vm175, %v875, 0
    %1340 = vmatprep.subr.mxu0 0.0
    %1341 = vmatpush1.msra.mxu0 %v1335
    %1342 = vmatprep.subr.mxu0 0.0
    %1343 = vmatpush1.msra.mxu0 0.0
    %1344 = vmatprep.subr.mxu0 0.0
    %1345 = vmatpush1.msra.mxu0 0.0
    %1346 = vmatprep.subr.mxu0 0.0
    %1347 = vmatpush1.msra.mxu0 0.0
    %1348 = vmatprep.subr.mxu0 0.0
    %1349 = vmatpush1.msra.mxu0 0.0
    %1350 = vmatprep.subr.mxu0 0.0
    %1351 = vmatpush1.msra.mxu0 0.0
    %1352 = vmatprep.subr.mxu0 0.0
    %1353 = vmatpush1.msra.mxu0 0.0
    %1354 = vmatprep.subr.mxu0 0.0
    %1355 = vmatpush1.msra.mxu0 0.0
    %1356 = vmatprep.subr.mxu0 0.0
    %1357 = vmatpush1.msra.mxu0 0.0
    %1358 = vmatprep.subr.mxu0 0.0
    %1359 = vmatpush1.msra.mxu0 0.0
    %1360 = vmatprep.subr.mxu0 0.0
    %1361 = vmatpush1.msra.mxu0 0.0
    %1362 = vmatprep.subr.mxu0 0.0
    %1363 = vmatpush1.msra.mxu0 0.0
    %1364 = vmatprep.subr.mxu0 0.0
    %1365 = vmatpush1.msra.mxu0 0.0
    %1366 = vmatprep.subr.mxu0 0.0
    %1367 = vmatpush1.msra.mxu0 0.0
    %1368 = vmatprep.subr.mxu0 0.0
    %1369 = vmatpush1.msra.mxu0 0.0
    %1370 = vmatprep.subr.mxu0 0.0
    %1371 = vmatpush1.msra.mxu0 0.0
    %1372 = vmatprep.subr.mxu0 0.0
    %1373 = vmatpush1.msra.mxu0 0.0
    %1374 = vmatprep.subr.mxu0 0.0
    %1375 = vmatpush1.msra.mxu0 0.0
    %1376 = vmatprep.subr.mxu0 0.0
    %1377 = vmatpush1.msra.mxu0 0.0
    %1378 = vmatprep.subr.mxu0 0.0
    %1379 = vmatpush1.msra.mxu0 0.0
    %1380 = vmatprep.subr.mxu0 0.0
    %1381 = vmatpush1.msra.mxu0 0.0
    %1382 = vmatprep.subr.mxu0 0.0
    %1383 = vmatpush1.msra.mxu0 0.0
    %1384 = vmatprep.subr.mxu0 0.0
    %1385 = vmatpush1.msra.mxu0 0.0
    %1386 = vmatprep.subr.mxu0 0.0
    %1387 = vmatpush1.msra.mxu0 0.0
    %1388 = vmatprep.subr.mxu0 0.0
    %1389 = vmatpush1.msra.mxu0 0.0
    %1390 = vmatprep.subr.mxu0 0.0
    %1391 = vmatpush1.msra.mxu0 0.0
    %1392 = vmatprep.subr.mxu0 0.0
    %1393 = vmatpush1.msra.mxu0 0.0
    %1394 = vmatprep.subr.mxu0 0.0
    %1395 = vmatpush1.msra.mxu0 0.0
    %1396 = vmatprep.subr.mxu0 0.0
    %1397 = vmatpush1.msra.mxu0 0.0
    %1398 = vmatprep.subr.mxu0 0.0
    %1399 = vmatpush1.msra.mxu0 0.0
    %1400 = vmatprep.subr.mxu0 0.0
    %1401 = vmatpush1.msra.mxu0 0.0
    %1402 = vmatprep.subr.mxu0 0.0
    %1403 = vmatpush1.msra.mxu0 0.0
    %1404 = vmatprep.mubr.f32.mxu0 0.0
    %1405 = vmatmul.mubr.f32.gmra.mrb[0].mxu0 %v1338
    %v1406 = vpop.f32.mrb[0].mxu0
    %v1407 = vadd.f32 0.0, %v1406
    %v1408 = vpop.f32.mrb[0].mxu0
    %1409 = vdwg.mxu0
    %1410 = vrot.lane.b32.xlu0 %v172, 64
    %v1411 = vpop.permute.xlu0 %1410
    %v1414 = vsel %vm175, %v877, 0
    %1416 = vmatprep.subr.mxu0 0.0
    %1417 = vmatpush1.msra.mxu0 %v1411
    %1418 = vmatprep.subr.mxu0 0.0
    %1419 = vmatpush1.msra.mxu0 0.0
    %1420 = vmatprep.subr.mxu0 0.0
    %1421 = vmatpush1.msra.mxu0 0.0
    %1422 = vmatprep.subr.mxu0 0.0
    %1423 = vmatpush1.msra.mxu0 0.0
    %1424 = vmatprep.subr.mxu0 0.0
    %1425 = vmatpush1.msra.mxu0 0.0
    %1426 = vmatprep.subr.mxu0 0.0
    %1427 = vmatpush1.msra.mxu0 0.0
    %1428 = vmatprep.subr.mxu0 0.0
    %1429 = vmatpush1.msra.mxu0 0.0
    %1430 = vmatprep.subr.mxu0 0.0
    %1431 = vmatpush1.msra.mxu0 0.0
    %1432 = vmatprep.subr.mxu0 0.0
    %1433 = vmatpush1.msra.mxu0 0.0
    %1434 = vmatprep.subr.mxu0 0.0
    %1435 = vmatpush1.msra.mxu0 0.0
    %1436 = vmatprep.subr.mxu0 0.0
    %1437 = vmatpush1.msra.mxu0 0.0
    %1438 = vmatprep.subr.mxu0 0.0
    %1439 = vmatpush1.msra.mxu0 0.0
    %1440 = vmatprep.subr.mxu0 0.0
    %1441 = vmatpush1.msra.mxu0 0.0
    %1442 = vmatprep.subr.mxu0 0.0
    %1443 = vmatpush1.msra.mxu0 0.0
    %1444 = vmatprep.subr.mxu0 0.0
    %1445 = vmatpush1.msra.mxu0 0.0
    %1446 = vmatprep.subr.mxu0 0.0
    %1447 = vmatpush1.msra.mxu0 0.0
    %1448 = vmatprep.subr.mxu0 0.0
    %1449 = vmatpush1.msra.mxu0 0.0
    %1450 = vmatprep.subr.mxu0 0.0
    %1451 = vmatpush1.msra.mxu0 0.0
    %1452 = vmatprep.subr.mxu0 0.0
    %1453 = vmatpush1.msra.mxu0 0.0
    %1454 = vmatprep.subr.mxu0 0.0
    %1455 = vmatpush1.msra.mxu0 0.0
    %1456 = vmatprep.subr.mxu0 0.0
    %1457 = vmatpush1.msra.mxu0 0.0
    %1458 = vmatprep.subr.mxu0 0.0
    %1459 = vmatpush1.msra.mxu0 0.0
    %1460 = vmatprep.subr.mxu0 0.0
    %1461 = vmatpush1.msra.mxu0 0.0
    %1462 = vmatprep.subr.mxu0 0.0
    %1463 = vmatpush1.msra.mxu0 0.0
    %1464 = vmatprep.subr.mxu0 0.0
    %1465 = vmatpush1.msra.mxu0 0.0
    %1466 = vmatprep.subr.mxu0 0.0
    %1467 = vmatpush1.msra.mxu0 0.0
    %1468 = vmatprep.subr.mxu0 0.0
    %1469 = vmatpush1.msra.mxu0 0.0
    %1470 = vmatprep.subr.mxu0 0.0
    %1471 = vmatpush1.msra.mxu0 0.0
    %1472 = vmatprep.subr.mxu0 0.0
    %1473 = vmatpush1.msra.mxu0 0.0
    %1474 = vmatprep.subr.mxu0 0.0
    %1475 = vmatpush1.msra.mxu0 0.0
    %1476 = vmatprep.subr.mxu0 0.0
    %1477 = vmatpush1.msra.mxu0 0.0
    %1478 = vmatprep.subr.mxu0 0.0
    %1479 = vmatpush1.msra.mxu0 0.0
    %1480 = vmatprep.mubr.f32.mxu0 0.0
    %1481 = vmatmul.mubr.f32.gmra.mrb[0].mxu0 %v1414
    %v1482 = vpop.f32.mrb[0].mxu0
    %v1483 = vadd.f32 0.0, %v1482
    %v1484 = vpop.f32.mrb[0].mxu0
    %1485 = vdwg.mxu0
    %v1486 = vld [vmem:[%s3] sm:$0xff]
    %v1487 = vld [vmem:[%s3 + $0x8] sm:$0xff]
    %v1488 = vld [vmem:[%s3 + $0x10] sm:$0xff]
    %v1489 = vld [vmem:[%s3 + $0x18] sm:$0xff]
    %v1491 = vsel %vm175, %v951, 0
    %v1494 = vsel %vm175, %v1027, 0
    %1496 = vmatprep.subr.mxu0 0.0
    %1497 = vmatpush1.msra.mxu0 %v1486
    %1498 = vmatprep.subr.mxu0 0.0
    %1499 = vmatpush1.msra.mxu0 0.0
    %1500 = vmatprep.subr.mxu0 0.0
    %1501 = vmatpush1.msra.mxu0 0.0
    %1502 = vmatprep.subr.mxu0 0.0
    %1503 = vmatpush1.msra.mxu0 0.0
    %1504 = vmatprep.subr.mxu0 0.0
    %1505 = vmatpush1.msra.mxu0 0.0
    %1506 = vmatprep.subr.mxu0 0.0
    %1507 = vmatpush1.msra.mxu0 0.0
    %1508 = vmatprep.subr.mxu0 0.0
    %1509 = vmatpush1.msra.mxu0 0.0
    %1510 = vmatprep.subr.mxu0 0.0
    %1511 = vmatpush1.msra.mxu0 0.0
    %1512 = vmatprep.subr.mxu0 0.0
    %1513 = vmatpush1.msra.mxu0 0.0
    %1514 = vmatprep.subr.mxu0 0.0
    %1515 = vmatpush1.msra.mxu0 0.0
    %1516 = vmatprep.subr.mxu0 0.0
    %1517 = vmatpush1.msra.mxu0 0.0
    %1518 = vmatprep.subr.mxu0 0.0
    %1519 = vmatpush1.msra.mxu0 0.0
    %1520 = vmatprep.subr.mxu0 0.0
    %1521 = vmatpush1.msra.mxu0 0.0
    %1522 = vmatprep.subr.mxu0 0.0
    %1523 = vmatpush1.msra.mxu0 0.0
    %1524 = vmatprep.subr.mxu0 0.0
    %1525 = vmatpush1.msra.mxu0 0.0
    %1526 = vmatprep.subr.mxu0 0.0
    %1527 = vmatpush1.msra.mxu0 0.0
    %1528 = vmatprep.subr.mxu0 0.0
    %1529 = vmatpush1.msra.mxu0 0.0
    %1530 = vmatprep.subr.mxu0 0.0
    %1531 = vmatpush1.msra.mxu0 0.0
    %1532 = vmatprep.subr.mxu0 0.0
    %1533 = vmatpush1.msra.mxu0 0.0
    %1534 = vmatprep.subr.mxu0 0.0
    %1535 = vmatpush1.msra.mxu0 0.0
    %1536 = vmatprep.subr.mxu0 0.0
    %1537 = vmatpush1.msra.mxu0 0.0
    %1538 = vmatprep.subr.mxu0 0.0
    %1539 = vmatpush1.msra.mxu0 0.0
    %1540 = vmatprep.subr.mxu0 0.0
    %1541 = vmatpush1.msra.mxu0 0.0
    %1542 = vmatprep.subr.mxu0 0.0
    %1543 = vmatpush1.msra.mxu0 0.0
    %1544 = vmatprep.subr.mxu0 0.0
    %1545 = vmatpush1.msra.mxu0 0.0
    %1546 = vmatprep.subr.mxu0 0.0
    %1547 = vmatpush1.msra.mxu0 0.0
    %1548 = vmatprep.subr.mxu0 0.0
    %1549 = vmatpush1.msra.mxu0 0.0
    %1550 = vmatprep.subr.mxu0 0.0
    %1551 = vmatpush1.msra.mxu0 0.0
    %1552 = vmatprep.subr.mxu0 0.0
    %1553 = vmatpush1.msra.mxu0 0.0
    %1554 = vmatprep.subr.mxu0 0.0
    %1555 = vmatpush1.msra.mxu0 0.0
    %1556 = vmatprep.subr.mxu0 0.0
    %1557 = vmatpush1.msra.mxu0 0.0
    %1558 = vmatprep.subr.mxu0 0.0
    %1559 = vmatpush1.msra.mxu0 0.0
    %1560 = vmatprep.mubr.f32.mxu0 0.0
    %1561 = vmatmul.mubr.f32.gmra.mrb[0].mxu0 %v1491
    %v1562 = vpop.f32.mrb[0].mxu0
    %v1563 = vadd.f32 0.0, %v1562
    %v1564 = vpop.f32.mrb[0].mxu0
    %1565 = vmatprep.mubr.f32.mxu0 0.0
    %1566 = vmatmul.mubr.f32.gmra.mrb[0].mxu0 %v1494
    %v1567 = vpop.f32.mrb[0].mxu0
    %v1568 = vadd.f32 0.0, %v1567
    %v1569 = vpop.f32.mrb[0].mxu0
    %1570 = vdwg.mxu0
    %v1572 = vsel %vm175, %v1103, 0
    %v1575 = vsel %vm175, %v1179, 0
    %1577 = vmatprep.subr.mxu0 0.0
    %1578 = vmatpush1.msra.mxu0 %v1487
    %1579 = vmatprep.subr.mxu0 0.0
    %1580 = vmatpush1.msra.mxu0 0.0
    %1581 = vmatprep.subr.mxu0 0.0
    %1582 = vmatpush1.msra.mxu0 0.0
    %1583 = vmatprep.subr.mxu0 0.0
    %1584 = vmatpush1.msra.mxu0 0.0
    %1585 = vmatprep.subr.mxu0 0.0
    %1586 = vmatpush1.msra.mxu0 0.0
    %1587 = vmatprep.subr.mxu0 0.0
    %1588 = vmatpush1.msra.mxu0 0.0
    %1589 = vmatprep.subr.mxu0 0.0
    %1590 = vmatpush1.msra.mxu0 0.0
    %1591 = vmatprep.subr.mxu0 0.0
    %1592 = vmatpush1.msra.mxu0 0.0
    %1593 = vmatprep.subr.mxu0 0.0
    %1594 = vmatpush1.msra.mxu0 0.0
    %1595 = vmatprep.subr.mxu0 0.0
    %1596 = vmatpush1.msra.mxu0 0.0
    %1597 = vmatprep.subr.mxu0 0.0
    %1598 = vmatpush1.msra.mxu0 0.0
    %1599 = vmatprep.subr.mxu0 0.0
    %1600 = vmatpush1.msra.mxu0 0.0
    %1601 = vmatprep.subr.mxu0 0.0
    %1602 = vmatpush1.msra.mxu0 0.0
    %1603 = vmatprep.subr.mxu0 0.0
    %1604 = vmatpush1.msra.mxu0 0.0
    %1605 = vmatprep.subr.mxu0 0.0
    %1606 = vmatpush1.msra.mxu0 0.0
    %1607 = vmatprep.subr.mxu0 0.0
    %1608 = vmatpush1.msra.mxu0 0.0
    %1609 = vmatprep.subr.mxu0 0.0
    %1610 = vmatpush1.msra.mxu0 0.0
    %1611 = vmatprep.subr.mxu0 0.0
    %1612 = vmatpush1.msra.mxu0 0.0
    %1613 = vmatprep.subr.mxu0 0.0
    %1614 = vmatpush1.msra.mxu0 0.0
    %1615 = vmatprep.subr.mxu0 0.0
    %1616 = vmatpush1.msra.mxu0 0.0
    %1617 = vmatprep.subr.mxu0 0.0
    %1618 = vmatpush1.msra.mxu0 0.0
    %1619 = vmatprep.subr.mxu0 0.0
    %1620 = vmatpush1.msra.mxu0 0.0
    %1621 = vmatprep.subr.mxu0 0.0
    %1622 = vmatpush1.msra.mxu0 0.0
    %1623 = vmatprep.subr.mxu0 0.0
    %1624 = vmatpush1.msra.mxu0 0.0
    %1625 = vmatprep.subr.mxu0 0.0
    %1626 = vmatpush1.msra.mxu0 0.0
    %1627 = vmatprep.subr.mxu0 0.0
    %1628 = vmatpush1.msra.mxu0 0.0
    %1629 = vmatprep.subr.mxu0 0.0
    %1630 = vmatpush1.msra.mxu0 0.0
    %1631 = vmatprep.subr.mxu0 0.0
    %1632 = vmatpush1.msra.mxu0 0.0
    %1633 = vmatprep.subr.mxu0 0.0
    %1634 = vmatpush1.msra.mxu0 0.0
    %1635 = vmatprep.subr.mxu0 0.0
    %1636 = vmatpush1.msra.mxu0 0.0
    %1637 = vmatprep.subr.mxu0 0.0
    %1638 = vmatpush1.msra.mxu0 0.0
    %1639 = vmatprep.subr.mxu0 0.0
    %1640 = vmatpush1.msra.mxu0 0.0
    %1641 = vmatprep.mubr.f32.mxu0 0.0
    %1642 = vmatmul.mubr.f32.gmra.mrb[0].mxu0 %v1572
    %v1643 = vpop.f32.mrb[0].mxu0
    %v1644 = vadd.f32 0.0, %v1643
    %v1645 = vpop.f32.mrb[0].mxu0
    %1646 = vmatprep.mubr.f32.mxu0 0.0
    %1647 = vmatmul.mubr.f32.gmra.mrb[0].mxu0 %v1575
    %v1648 = vpop.f32.mrb[0].mxu0
    %v1649 = vadd.f32 0.0, %v1648
    %v1650 = vpop.f32.mrb[0].mxu0
    %1651 = vdwg.mxu0
    %v1653 = vsel %vm175, %v1255, 0
    %v1656 = vsel %vm175, %v1331, 0
    %1658 = vmatprep.subr.mxu0 0.0
    %1659 = vmatpush1.msra.mxu0 %v1488
    %1660 = vmatprep.subr.mxu0 0.0
    %1661 = vmatpush1.msra.mxu0 0.0
    %1662 = vmatprep.subr.mxu0 0.0
    %1663 = vmatpush1.msra.mxu0 0.0
    %1664 = vmatprep.subr.mxu0 0.0
    %1665 = vmatpush1.msra.mxu0 0.0
    %1666 = vmatprep.subr.mxu0 0.0
    %1667 = vmatpush1.msra.mxu0 0.0
    %1668 = vmatprep.subr.mxu0 0.0
    %1669 = vmatpush1.msra.mxu0 0.0
    %1670 = vmatprep.subr.mxu0 0.0
    %1671 = vmatpush1.msra.mxu0 0.0
    %1672 = vmatprep.subr.mxu0 0.0
    %1673 = vmatpush1.msra.mxu0 0.0
    %1674 = vmatprep.subr.mxu0 0.0
    %1675 = vmatpush1.msra.mxu0 0.0
    %1676 = vmatprep.subr.mxu0 0.0
    %1677 = vmatpush1.msra.mxu0 0.0
    %1678 = vmatprep.subr.mxu0 0.0
    %1679 = vmatpush1.msra.mxu0 0.0
    %1680 = vmatprep.subr.mxu0 0.0
    %1681 = vmatpush1.msra.mxu0 0.0
    %1682 = vmatprep.subr.mxu0 0.0
    %1683 = vmatpush1.msra.mxu0 0.0
    %1684 = vmatprep.subr.mxu0 0.0
    %1685 = vmatpush1.msra.mxu0 0.0
    %1686 = vmatprep.subr.mxu0 0.0
    %1687 = vmatpush1.msra.mxu0 0.0
    %1688 = vmatprep.subr.mxu0 0.0
    %1689 = vmatpush1.msra.mxu0 0.0
    %1690 = vmatprep.subr.mxu0 0.0
    %1691 = vmatpush1.msra.mxu0 0.0
    %1692 = vmatprep.subr.mxu0 0.0
    %1693 = vmatpush1.msra.mxu0 0.0
    %1694 = vmatprep.subr.mxu0 0.0
    %1695 = vmatpush1.msra.mxu0 0.0
    %1696 = vmatprep.subr.mxu0 0.0
    %1697 = vmatpush1.msra.mxu0 0.0
    %1698 = vmatprep.subr.mxu0 0.0
    %1699 = vmatpush1.msra.mxu0 0.0
    %1700 = vmatprep.subr.mxu0 0.0
    %1701 = vmatpush1.msra.mxu0 0.0
    %1702 = vmatprep.subr.mxu0 0.0
    %1703 = vmatpush1.msra.mxu0 0.0
    %1704 = vmatprep.subr.mxu0 0.0
    %1705 = vmatpush1.msra.mxu0 0.0
    %1706 = vmatprep.subr.mxu0 0.0
    %1707 = vmatpush1.msra.mxu0 0.0
    %1708 = vmatprep.subr.mxu0 0.0
    %1709 = vmatpush1.msra.mxu0 0.0
    %1710 = vmatprep.subr.mxu0 0.0
    %1711 = vmatpush1.msra.mxu0 0.0
    %1712 = vmatprep.subr.mxu0 0.0
    %1713 = vmatpush1.msra.mxu0 0.0
    %1714 = vmatprep.subr.mxu0 0.0
    %1715 = vmatpush1.msra.mxu0 0.0
    %1716 = vmatprep.subr.mxu0 0.0
    %1717 = vmatpush1.msra.mxu0 0.0
    %1718 = vmatprep.subr.mxu0 0.0
    %1719 = vmatpush1.msra.mxu0 0.0
    %1720 = vmatprep.subr.mxu0 0.0
    %1721 = vmatpush1.msra.mxu0 0.0
    %1722 = vmatprep.mubr.f32.mxu0 0.0
    %1723 = vmatmul.mubr.f32.gmra.mrb[0].mxu0 %v1653
    %v1724 = vpop.f32.mrb[0].mxu0
    %v1725 = vadd.f32 0.0, %v1724
    %v1726 = vpop.f32.mrb[0].mxu0
    %1727 = vmatprep.mubr.f32.mxu0 0.0
    %1728 = vmatmul.mubr.f32.gmra.mrb[0].mxu0 %v1656
    %v1729 = vpop.f32.mrb[0].mxu0
    %v1730 = vadd.f32 0.0, %v1729
    %v1731 = vpop.f32.mrb[0].mxu0
    %1732 = vdwg.mxu0
    %v1734 = vsel %vm175, %v1407, 0
    %v1737 = vsel %vm175, %v1483, 0
    %1739 = vmatprep.subr.mxu0 0.0
    %1740 = vmatpush1.msra.mxu0 %v1489
    %1741 = vmatprep.subr.mxu0 0.0
    %1742 = vmatpush1.msra.mxu0 0.0
    %1743 = vmatprep.subr.mxu0 0.0
    %1744 = vmatpush1.msra.mxu0 0.0
    %1745 = vmatprep.subr.mxu0 0.0
    %1746 = vmatpush1.msra.mxu0 0.0
    %1747 = vmatprep.subr.mxu0 0.0
    %1748 = vmatpush1.msra.mxu0 0.0
    %1749 = vmatprep.subr.mxu0 0.0
    %1750 = vmatpush1.msra.mxu0 0.0
    %1751 = vmatprep.subr.mxu0 0.0
    %1752 = vmatpush1.msra.mxu0 0.0
    %1753 = vmatprep.subr.mxu0 0.0
    %1754 = vmatpush1.msra.mxu0 0.0
    %1755 = vmatprep.subr.mxu0 0.0
    %1756 = vmatpush1.msra.mxu0 0.0
    %1757 = vmatprep.subr.mxu0 0.0
    %1758 = vmatpush1.msra.mxu0 0.0
    %1759 = vmatprep.subr.mxu0 0.0
    %1760 = vmatpush1.msra.mxu0 0.0
    %1761 = vmatprep.subr.mxu0 0.0
    %1762 = vmatpush1.msra.mxu0 0.0
    %1763 = vmatprep.subr.mxu0 0.0
    %1764 = vmatpush1.msra.mxu0 0.0
    %1765 = vmatprep.subr.mxu0 0.0
    %1766 = vmatpush1.msra.mxu0 0.0
    %1767 = vmatprep.subr.mxu0 0.0
    %1768 = vmatpush1.msra.mxu0 0.0
    %1769 = vmatprep.subr.mxu0 0.0
    %1770 = vmatpush1.msra.mxu0 0.0
    %1771 = vmatprep.subr.mxu0 0.0
    %1772 = vmatpush1.msra.mxu0 0.0
    %1773 = vmatprep.subr.mxu0 0.0
    %1774 = vmatpush1.msra.mxu0 0.0
    %1775 = vmatprep.subr.mxu0 0.0
    %1776 = vmatpush1.msra.mxu0 0.0
    %1777 = vmatprep.subr.mxu0 0.0
    %1778 = vmatpush1.msra.mxu0 0.0
    %1779 = vmatprep.subr.mxu0 0.0
    %1780 = vmatpush1.msra.mxu0 0.0
    %1781 = vmatprep.subr.mxu0 0.0
    %1782 = vmatpush1.msra.mxu0 0.0
    %1783 = vmatprep.subr.mxu0 0.0
    %1784 = vmatpush1.msra.mxu0 0.0
    %1785 = vmatprep.subr.mxu0 0.0
    %1786 = vmatpush1.msra.mxu0 0.0
    %1787 = vmatprep.subr.mxu0 0.0
    %1788 = vmatpush1.msra.mxu0 0.0
    %1789 = vmatprep.subr.mxu0 0.0
    %1790 = vmatpush1.msra.mxu0 0.0
    %1791 = vmatprep.subr.mxu0 0.0
    %1792 = vmatpush1.msra.mxu0 0.0
    %1793 = vmatprep.subr.mxu0 0.0
    %1794 = vmatpush1.msra.mxu0 0.0
    %1795 = vmatprep.subr.mxu0 0.0
    %1796 = vmatpush1.msra.mxu0 0.0
    %1797 = vmatprep.subr.mxu0 0.0
    %1798 = vmatpush1.msra.mxu0 0.0
    %1799 = vmatprep.subr.mxu0 0.0
    %1800 = vmatpush1.msra.mxu0 0.0
    %1801 = vmatprep.subr.mxu0 0.0
    %1802 = vmatpush1.msra.mxu0 0.0
    %1803 = vmatprep.mubr.f32.mxu0 0.0
    %1804 = vmatmul.mubr.f32.gmra.mrb[0].mxu0 %v1734
    %v1805 = vpop.f32.mrb[0].mxu0
    %v1806 = vadd.f32 0.0, %v1805
    %v1807 = vpop.f32.mrb[0].mxu0
    %1808 = vmatprep.mubr.f32.mxu0 0.0
    %1809 = vmatmul.mubr.f32.gmra.mrb[0].mxu0 %v1737
    %v1810 = vpop.f32.mrb[0].mxu0
    %v1811 = vadd.f32 0.0, %v1810
    %v1812 = vpop.f32.mrb[0].mxu0
    %1813 = vdwg.mxu0
    %v1814 = vsel %vm77, %v1563, 0.0
    %v1815 = vsel %vm77, %v1644, 0.0
    %v1816 = vadd.f32 %v1814, %v1815
    %v1817 = vsel %vm77, %v1725, 0.0
    %v1818 = vadd.f32 %v1816, %v1817
    %v1819 = vsel %vm77, %v1806, 0.0
    %v1820 = vadd.f32 %v1818, %v1819
    %v1821 = vsel %vm77, %v1568, 0.0
    %v1822 = vsel %vm77, %v1649, 0.0
    %v1823 = vadd.f32 %v1821, %v1822
    %v1824 = vsel %vm77, %v1730, 0.0
    %v1825 = vadd.f32 %v1823, %v1824
    %v1826 = vsel %vm77, %v1811, 0.0
    %v1827 = vadd.f32 %v1825, %v1826
    %v1828 = vlaneseq
    %v1829 = vshrl.u32 %v1828, 7
    %v1830 = vsub.s32 2, %v1829
    %v1831 = vrot.slane %v68, %v1830
    %v1832 = vadd.f32 %v1820, %v1831
    %v1833 = vadd.f32 %v1827, %v1831
    %v1834 = vadd.f32 %v64, %v1832
    %v1835 = vadd.f32 %v65, %v1833
    %v1836 = vsel %vm77, %v1834, 0.0
    %1837 = vadd.xlane.f32.xlu0 %v1836
    %v1838 = vpop.xlane.xlu0 %1837
    %v1839 = vsel %vm77, %v1835, 0.0
    %1840 = vadd.xlane.f32.xlu0 %v1839
    %v1841 = vpop.xlane.xlu0 %1840
    %v1842 = vrcp.pop 32.0
    %v1843 = vmul.f32 %v1838, %v1842
    %v1844 = vmul.f32 %v1841, %v1842
    %v1845 = vsub.f32 %v1834, %v1843
    %v1846 = vsub.f32 %v1835, %v1844
    %v1847 = vmul.f32 %v1845, %v1845
    %v1848 = vmul.f32 %v1846, %v1846
    %v1849 = vsel %vm77, %v1847, 0.0
    %1850 = vadd.xlane.f32.xlu0 %v1849
    %v1851 = vpop.xlane.xlu0 %1850
    %v1852 = vsel %vm77, %v1848, 0.0
    %1853 = vadd.xlane.f32.xlu0 %v1852
    %v1854 = vpop.xlane.xlu0 %1853
    %v1855 = vmul.f32 %v1851, %v1842
    %v1856 = vmul.f32 %v1854, %v1842
    %v1857 = vadd.f32 %v1855, 1e-05
    %v1858 = vadd.f32 %v1856, 1e-05
    %v1859 = vrsqrt.pop %v1857
    %v1860 = vrsqrt.pop %v1858
    %v1861 = vmul.f32 %v1845, %v1859
    %v1862 = vmul.f32 %v1846, %v1860
    %v1863 = vlaneseq
    %v1864 = vshrl.u32 %v1863, 7
    %v1865 = vsub.s32 3, %v1864
    %v1866 = vrot.slane %v68, %v1865
    %v1867 = vmul.f32 %v1861, %v1866
    %v1868 = vmul.f32 %v1862, %v1866
    %v1869 = vlaneseq
    %v1870 = vshrl.u32 %v1869, 7
    %v1871 = vsub.s32 4, %v1870
    %v1872 = vrot.slane %v68, %v1871
    %v1873 = vadd.f32 %v1867, %v1872
    %v1874 = vadd.f32 %v1868, %v1872
    %v1875 = vld [vmem:[%s4] sm:$0xff]
    %v1876 = vld [vmem:[%s4 + $0x8] sm:$0xff]
    %v1877 = vld [vmem:[%s4 + $0x10] sm:$0xff]
    %v1878 = vld [vmem:[%s4 + $0x18] sm:$0xff]
    %v1879 = vlaneseq
    %v1880 = vshrl.u32 %v1879, 7
    %v1881 = vsub.s32 1, %v1880
    %v1882 = vrot.slane %v68, %v1881
    %v1884 = vsel %vm77, %v1873, 0
    %v1887 = vsel %vm77, %v1874, 0
    %1889 = vmatprep.subr.mxu0 0.0
    %1890 = vmatpush1.msra.mxu0 %v1875
    %1891 = vmatprep.subr.mxu0 0.0
    %1892 = vmatpush1.msra.mxu0 %v1876
    %1893 = vmatprep.subr.mxu0 0.0
    %1894 = vmatpush1.msra.mxu0 %v1877
    %1895 = vmatprep.subr.mxu0 0.0
    %1896 = vmatpush1.msra.mxu0 %v1878
    %1897 = vmatprep.subr.mxu0 0.0
    %1898 = vmatpush1.msra.mxu0 0.0
    %1899 = vmatprep.subr.mxu0 0.0
    %1900 = vmatpush1.msra.mxu0 0.0
    %1901 = vmatprep.subr.mxu0 0.0
    %1902 = vmatpush1.msra.mxu0 0.0
    %1903 = vmatprep.subr.mxu0 0.0
    %1904 = vmatpush1.msra.mxu0 0.0
    %1905 = vmatprep.subr.mxu0 0.0
    %1906 = vmatpush1.msra.mxu0 0.0
    %1907 = vmatprep.subr.mxu0 0.0
    %1908 = vmatpush1.msra.mxu0 0.0
    %1909 = vmatprep.subr.mxu0 0.0
    %1910 = vmatpush1.msra.mxu0 0.0
    %1911 = vmatprep.subr.mxu0 0.0
    %1912 = vmatpush1.msra.mxu0 0.0
    %1913 = vmatprep.subr.mxu0 0.0
    %1914 = vmatpush1.msra.mxu0 0.0
    %1915 = vmatprep.subr.mxu0 0.0
    %1916 = vmatpush1.msra.mxu0 0.0
    %1917 = vmatprep.subr.mxu0 0.0
    %1918 = vmatpush1.msra.mxu0 0.0
    %1919 = vmatprep.subr.mxu0 0.0
    %1920 = vmatpush1.msra.mxu0 0.0
    %1921 = vmatprep.subr.mxu0 0.0
    %1922 = vmatpush1.msra.mxu0 0.0
    %1923 = vmatprep.subr.mxu0 0.0
    %1924 = vmatpush1.msra.mxu0 0.0
    %1925 = vmatprep.subr.mxu0 0.0
    %1926 = vmatpush1.msra.mxu0 0.0
    %1927 = vmatprep.subr.mxu0 0.0
    %1928 = vmatpush1.msra.mxu0 0.0
    %1929 = vmatprep.subr.mxu0 0.0
    %1930 = vmatpush1.msra.mxu0 0.0
    %1931 = vmatprep.subr.mxu0 0.0
    %1932 = vmatpush1.msra.mxu0 0.0
    %1933 = vmatprep.subr.mxu0 0.0
    %1934 = vmatpush1.msra.mxu0 0.0
    %1935 = vmatprep.subr.mxu0 0.0
    %1936 = vmatpush1.msra.mxu0 0.0
    %1937 = vmatprep.subr.mxu0 0.0
    %1938 = vmatpush1.msra.mxu0 0.0
    %1939 = vmatprep.subr.mxu0 0.0
    %1940 = vmatpush1.msra.mxu0 0.0
    %1941 = vmatprep.subr.mxu0 0.0
    %1942 = vmatpush1.msra.mxu0 0.0
    %1943 = vmatprep.subr.mxu0 0.0
    %1944 = vmatpush1.msra.mxu0 0.0
    %1945 = vmatprep.subr.mxu0 0.0
    %1946 = vmatpush1.msra.mxu0 0.0
    %1947 = vmatprep.subr.mxu0 0.0
    %1948 = vmatpush1.msra.mxu0 0.0
    %1949 = vmatprep.subr.mxu0 0.0
    %1950 = vmatpush1.msra.mxu0 0.0
    %1951 = vmatprep.subr.mxu0 0.0
    %1952 = vmatpush1.msra.mxu0 0.0
    %1953 = vmatprep.mubr.f32.mxu0 0.0
    %1954 = vmatmul.mubr.f32.gmra.mrb[0].mxu0 %v1884
    %v1955 = vpop.f32.mrb[0].mxu0
    %v1956 = vadd.f32 %v1882, %v1955
    %v1957 = vpop.f32.mrb[0].mxu0
    %1958 = vmatprep.mubr.f32.mxu0 0.0
    %1959 = vmatmul.mubr.f32.gmra.mrb[0].mxu0 %v1887
    %v1960 = vpop.f32.mrb[0].mxu0
    %v1961 = vadd.f32 %v1882, %v1960
    %v1962 = vpop.f32.mrb[0].mxu0
    %1963 = vdwg.mxu0
    %v1964 = vmul.f32 %v1956, 0.5
    %v1965 = vmul.f32 %v1961, 0.5
    %v1966 = vrcp.pop 1.4142135
    %v1967 = vmul.f32 %v1956, %v1966
    %v1968 = vmul.f32 %v1961, %v1966
    %v1969 = verf.f32.pop %v1967
    %v1970 = verf.f32.pop %v1968
    %v1971 = vadd.f32 %v1969, 1.0
    %v1972 = vadd.f32 %v1970, 1.0
    %v1973 = vmul.f32 %v1964, %v1971
    %v1974 = vmul.f32 %v1965, %v1972
    %v1975 = vld [vmem:[%s5] sm:$0xff]
    %v1976 = vld [vmem:[%s5 + $0x8] sm:$0xff]
    %v1977 = vld [vmem:[%s5 + $0x10] sm:$0xff]
    %v1978 = vld [vmem:[%s5 + $0x18] sm:$0xff]
    %v1979 = vld [vmem:[%s5 + $0x20] sm:$0xff]
    %v1980 = vld [vmem:[%s5 + $0x28] sm:$0xff]
    %v1981 = vld [vmem:[%s5 + $0x30] sm:$0xff]
    %v1982 = vld [vmem:[%s5 + $0x38] sm:$0xff]
    %v1983 = vlaneseq
    %v1984 = vshrl.u32 %v1983, 7
    %v1985 = vsub.s32 5, %v1984
    %v1986 = vrot.slane %v68, %v1985
    %vm1987 = vcmask 523264
    %v1989 = vsel %vm1987, %v1973, 0
    %v1992 = vsel %vm1987, %v1974, 0
    %1994 = vmatprep.subr.mxu0 0.0
    %1995 = vmatpush1.msra.mxu0 %v1975
    %1996 = vmatprep.subr.mxu0 0.0
    %1997 = vmatpush1.msra.mxu0 %v1976
    %1998 = vmatprep.subr.mxu0 0.0
    %1999 = vmatpush1.msra.mxu0 %v1977
    %2000 = vmatprep.subr.mxu0 0.0
    %2001 = vmatpush1.msra.mxu0 %v1978
    %2002 = vmatprep.subr.mxu0 0.0
    %2003 = vmatpush1.msra.mxu0 %v1979
    %2004 = vmatprep.subr.mxu0 0.0
    %2005 = vmatpush1.msra.mxu0 %v1980
    %2006 = vmatprep.subr.mxu0 0.0
    %2007 = vmatpush1.msra.mxu0 %v1981
    %2008 = vmatprep.subr.mxu0 0.0
    %2009 = vmatpush1.msra.mxu0 %v1982
    %2010 = vmatprep.subr.mxu0 0.0
    %2011 = vmatpush1.msra.mxu0 0.0
    %2012 = vmatprep.subr.mxu0 0.0
    %2013 = vmatpush1.msra.mxu0 0.0
    %2014 = vmatprep.subr.mxu0 0.0
    %2015 = vmatpush1.msra.mxu0 0.0
    %2016 = vmatprep.subr.mxu0 0.0
    %2017 = vmatpush1.msra.mxu0 0.0
    %2018 = vmatprep.subr.mxu0 0.0
    %2019 = vmatpush1.msra.mxu0 0.0
    %2020 = vmatprep.subr.mxu0 0.0
    %2021 = vmatpush1.msra.mxu0 0.0
    %2022 = vmatprep.subr.mxu0 0.0
    %2023 = vmatpush1.msra.mxu0 0.0
    %2024 = vmatprep.subr.mxu0 0.0
    %2025 = vmatpush1.msra.mxu0 0.0
    %2026 = vmatprep.subr.mxu0 0.0
    %2027 = vmatpush1.msra.mxu0 0.0
    %2028 = vmatprep.subr.mxu0 0.0
    %2029 = vmatpush1.msra.mxu0 0.0
    %2030 = vmatprep.subr.mxu0 0.0
    %2031 = vmatpush1.msra.mxu0 0.0
    %2032 = vmatprep.subr.mxu0 0.0
    %2033 = vmatpush1.msra.mxu0 0.0
    %2034 = vmatprep.subr.mxu0 0.0
    %2035 = vmatpush1.msra.mxu0 0.0
    %2036 = vmatprep.subr.mxu0 0.0
    %2037 = vmatpush1.msra.mxu0 0.0
    %2038 = vmatprep.subr.mxu0 0.0
    %2039 = vmatpush1.msra.mxu0 0.0
    %2040 = vmatprep.subr.mxu0 0.0
    %2041 = vmatpush1.msra.mxu0 0.0
    %2042 = vmatprep.subr.mxu0 0.0
    %2043 = vmatpush1.msra.mxu0 0.0
    %2044 = vmatprep.subr.mxu0 0.0
    %2045 = vmatpush1.msra.mxu0 0.0
    %2046 = vmatprep.subr.mxu0 0.0
    %2047 = vmatpush1.msra.mxu0 0.0
    %2048 = vmatprep.subr.mxu0 0.0
    %2049 = vmatpush1.msra.mxu0 0.0
    %2050 = vmatprep.subr.mxu0 0.0
    %2051 = vmatpush1.msra.mxu0 0.0
    %2052 = vmatprep.subr.mxu0 0.0
    %2053 = vmatpush1.msra.mxu0 0.0
    %2054 = vmatprep.subr.mxu0 0.0
    %2055 = vmatpush1.msra.mxu0 0.0
    %2056 = vmatprep.subr.mxu0 0.0
    %2057 = vmatpush1.msra.mxu0 0.0
    %2058 = vmatprep.mubr.f32.mxu0 0.0
    %2059 = vmatmul.mubr.f32.gmra.mrb[0].mxu0 %v1989
    %v2060 = vpop.f32.mrb[0].mxu0
    %v2061 = vadd.f32 %v1986, %v2060
    %v2062 = vpop.f32.mrb[0].mxu0
    %2063 = vmatprep.mubr.f32.mxu0 0.0
    %2064 = vmatmul.mubr.f32.gmra.mrb[0].mxu0 %v1992
    %v2065 = vpop.f32.mrb[0].mxu0
    %v2066 = vadd.f32 %v1986, %v2065
    %v2067 = vpop.f32.mrb[0].mxu0
    %2068 = vdwg.mxu0
    %v2069 = vadd.f32 %v1873, %v2061
    %v2070 = vadd.f32 %v1874, %v2066
    %v2071 = vsel %vm77, %v2069, 0.0
    %2072 = vadd.xlane.f32.xlu0 %v2071
    %v2073 = vpop.xlane.xlu0 %2072
    %v2074 = vsel %vm77, %v2070, 0.0
    %2075 = vadd.xlane.f32.xlu0 %v2074
    %v2076 = vpop.xlane.xlu0 %2075
    %v2077 = vmul.f32 %v2073, %v1842
    %v2078 = vmul.f32 %v2076, %v1842
    %v2079 = vsub.f32 %v2069, %v2077
    %v2080 = vsub.f32 %v2070, %v2078
    %v2081 = vmul.f32 %v2079, %v2079
    %v2082 = vmul.f32 %v2080, %v2080
    %v2083 = vsel %vm77, %v2081, 0.0
    %2084 = vadd.xlane.f32.xlu0 %v2083
    %v2085 = vpop.xlane.xlu0 %2084
    %v2086 = vsel %vm77, %v2082, 0.0
    %2087 = vadd.xlane.f32.xlu0 %v2086
    %v2088 = vpop.xlane.xlu0 %2087
    %v2089 = vmul.f32 %v2085, %v1842
    %v2090 = vmul.f32 %v2088, %v1842
    %v2091 = vadd.f32 %v2089, 1e-05
    %v2092 = vadd.f32 %v2090, 1e-05
    %v2093 = vrsqrt.pop %v2091
    %v2094 = vrsqrt.pop %v2092
    %v2095 = vmul.f32 %v2079, %v2093
    %v2096 = vmul.f32 %v2080, %v2094
    %v2097 = vlaneseq
    %v2098 = vshrl.u32 %v2097, 7
    %v2099 = vsub.s32 6, %v2098
    %v2100 = vrot.slane %v68, %v2099
    %v2101 = vmul.f32 %v2095, %v2100
    %v2102 = vmul.f32 %v2096, %v2100
    %v2103 = vlaneseq
    %v2104 = vshrl.u32 %v2103, 7
    %v2105 = vsub.s32 7, %v2104
    %v2106 = vrot.slane %v68, %v2105
    %v2107 = vadd.f32 %v2101, %v2106
    %v2108 = vadd.f32 %v2102, %v2106
    %2109 = vst.msk [vmem:[#allocation7] sm:$0xff] %vm77, %v2107
    %2110 = vst.msk [vmem:[#allocation7 + $0x8] sm:$0xff] %vm77, %v2108
    // Predicated region
    $region42: #{tpu_custom_call.1} parent=1 // pred_check
      _
    $region43: #{tpu_custom_call.1} parent=1 // pred_check_branch
      %2112 = sbr.rel (0) target = $region45
    $region44: #{tpu_custom_call.1} parent=1 // pred_region
      %s2114 = ssub.s32 256, 256
      %2115 = vsyncadd [#allocation4], %s2114
      %s2116 = sshll.u32 [#allocation7], 4
      %s2117 = int_to_ptr.vmem [resolvable:$true] %s2116
      %2122 = dma.vmem_to_hbm [thread:$0]  %s2117, 256, %s7, [#allocation4], 128, 128, 8
    $region45: #{tpu_custom_call.1} parent=1 // pred_fallthru
      _
    // Predicated region
    $region46: #{tpu_custom_call.1} parent=1 // pred_check
      _
    $region47: #{tpu_custom_call.1} parent=1 // pred_check_branch
      %2124 = sbr.rel (0) target = $region49
    $region48: #{tpu_custom_call.1} parent=1 // pred_region
      %2125 = dma.done [#allocation4], 256
    $region49: #{tpu_custom_call.1} parent=1 // pred_fallthru
      _
    %2126 = vsyncpa [#allocation3], 1
    %2127 = vsyncpa [#allocation6], 1
    %2128 = vsyncpa [#allocation4], 1

</llo_original>
